<compile_context>
chip_gen: v7x
topology: tpu7x:2x2x1
jax: 0.10.0
libtpu: 0.0.40
codegen_flags: <defaults>
</compile_context>

<pallas_src>
import functools

import jax
import jax.numpy as jnp
import numpy as np
from jax import lax
from jax.experimental import pallas as pl
from jax.experimental.pallas import tpu as pltpu

_LANE = 128
_SUBLANE = 8


def _round_up(x, m):
    return (x + m - 1) // m * m


# ----------------------------------------------------------------------------
# Pallas kernel: hoisted input projection + GRU recurrence + output Linear
# ----------------------------------------------------------------------------
def _rnn_concat_kernel(
    x_ref,        # (T, Bt, F)   f32, time-major input block
    embeds_ref,   # (Bt, E)      f32, concatenated embeddings block
    wih_ref,      # (F, 3Hp)     f32, W_ih^T, gate order [r, z, n], lane-aligned gates
    whh_ref,      # (Hp, 3Hp)    f32, W_hh^T, padded hidden rows
    bih_ref,      # (1, 3Hp)     f32
    bhh_ref,      # (1, 3Hp)     f32
    woh_ref,      # (Hp, Hp)     f32, output-linear weight (hidden part), transposed/padded
    woe_ref,      # (E, Hp)      f32, output-linear weight (embed part),  transposed/padded
    bo_ref,       # (1, Hp)      f32
    gru_out_ref,  # (T, Bt, Hp)  f32 output
    enc_ref,      # (Bt, Hp)     f32 output
    gx_ref,       # (T*Bt, 3Hp)  f32 VMEM scratch: precomputed input-gate projections
):
    T, Bt, F = x_ref.shape
    Hp = whh_ref.shape[0]

    # ---- hoisted input projection: one big MXU matmul, input bias folded in ----
    x_all = x_ref[...].reshape(T * Bt, F)                  # leading-dim collapse (Bt % 8 == 0)
    gx_ref[...] = (
        jnp.dot(x_all, wih_ref[...], preferred_element_type=jnp.float32)
        + bih_ref[...]
    )

    whh = whh_ref[...]
    bhh = jnp.broadcast_to(bhh_ref[...], (Bt, 3 * Hp))     # broadcast hoisted out of loop

    h0 = jnp.zeros((Bt, Hp), dtype=jnp.float32)

    def step(t, h):
        row = pl.multiple_of(t * Bt, _SUBLANE)
        gx = gx_ref[pl.ds(row, Bt), :]                     # (Bt, 3Hp) dense, sublane-aligned
        gh = jnp.dot(h, whh, preferred_element_type=jnp.float32) + bhh
        r = jax.nn.sigmoid(gx[:, 0:Hp] + gh[:, 0:Hp])
        z = jax.nn.sigmoid(gx[:, Hp:2 * Hp] + gh[:, Hp:2 * Hp])
        n = jnp.tanh(gx[:, 2 * Hp:3 * Hp] + r * gh[:, 2 * Hp:3 * Hp])
        h_new = (1.0 - z) * n + z * h
        gru_out_ref[t] = h_new                             # dense (Bt, Hp) store
        return h_new

    unroll = True if T <= 32 else 8
    h_final = lax.fori_loop(0, T, step, h0, unroll=unroll)

    # output_linear(cat(hidden, embeds)) == hidden @ W_h^T + embeds @ W_e^T + b
    enc_ref[...] = (
        jnp.dot(h_final, woh_ref[...], preferred_element_type=jnp.float32)
        + jnp.dot(embeds_ref[...], woe_ref[...], preferred_element_type=jnp.float32)
        + bo_ref[...]
    )


# ----------------------------------------------------------------------------
# Parameter packing (pre-transposed, lane-aligned gates)
# ----------------------------------------------------------------------------
def _pack_gate_weight_t(w, H, Hp):
    # w: (3H, K) gate-stacked [r, z, n]  ->  (K, 3Hp) transposed, each gate at g*Hp
    K = w.shape[1]
    out = jnp.zeros((K, 3 * Hp), jnp.float32)
    for g in range(3):
        out = out.at[:, g * Hp:g * Hp + H].set(w[g * H:(g + 1) * H, :].T)
    return out


def _pack_gate_bias(b, H, Hp):
    out = jnp.zeros((1, 3 * Hp), jnp.float32)
    for g in range(3):
        out = out.at[0, g * Hp:g * Hp + H].set(b[g * H:(g + 1) * H])
    return out


def _pick_batch_tile(B, T, F, Hp, E, budget_bytes=40 << 20):
    # f32 bytes per batch row across live VMEM buffers:
    #   x (x2 dbl-buf) + gx scratch + gru_out (x2) + enc (x2) + embeds (x2)
    per_row = 4 * (2 * T * F + 3 * T * Hp + 2 * T * Hp + 2 * Hp + 2 * max(E, 1))
    fit = max(_SUBLANE, (budget_bytes // per_row) // _SUBLANE * _SUBLANE)
    b_tile = int(min(128, fit, _round_up(B, _SUBLANE)))
    b_pad = _round_up(B, b_tile)
    return b_tile, b_pad


# ----------------------------------------------------------------------------
# Forward wrapper
# ----------------------------------------------------------------------------
def rnn_concat_encoder_forward(input_seq, input_cat, params):
    """Forward pass matching RNNConcatEncoder.forward (defaults: 1 layer, unidir).

    input_seq: (B, T) or (B, T, F) float32
    input_cat: (B, n_embeds) int32
    returns (gru_out (B, T, H), encoder_concat_hidden (B, H))
    """
    if input_seq.ndim < 3:
        input_seq = input_seq[:, :, None]
    input_seq = input_seq.astype(jnp.float32)

    # ---- embedding gather (glue, plain JAX) ----
    embeds = jnp.concatenate(
        [tbl[input_cat[:, i]] for i, tbl in enumerate(params["embed_tables"])],
        axis=1,
    ).astype(jnp.float32)                                  # (B, E)

    B, T, F = input_seq.shape
    H = params["w_hh"].shape[1]
    E = embeds.shape[1]
    Hp = _round_up(H, _LANE)                               # lane-aligned hidden size

    b_tile, b_pad = _pick_batch_tile(B, T, F, Hp, E)

    # time-major input, batch padded to a multiple of the batch tile
    # TODO(synk): the x transpose is tiny (F is small); the gru_out transpose below
    #             could be removed entirely if downstream consumed time-major output.
    x_tm = jnp.transpose(input_seq, (1, 0, 2))             # (T, B, F)
    x_tm = jnp.pad(x_tm, ((0, 0), (0, b_pad - B), (0, 0)))
    embeds_p = jnp.pad(embeds, ((0, b_pad - B), (0, 0)))

    # weights: pre-transposed, gates lane-aligned on Hp boundaries, zero-padded
    wih_t = _pack_gate_weight_t(params["w_ih"], H, Hp)                       # (F, 3Hp)
    whh_t = jnp.zeros((Hp, 3 * Hp), jnp.float32).at[:H, :].set(
        _pack_gate_weight_t(params["w_hh"], H, Hp))                          # (Hp, 3Hp)
    bih = _pack_gate_bias(params["b_ih"], H, Hp)                             # (1, 3Hp)
    bhh = _pack_gate_bias(params["b_hh"], H, Hp)                             # (1, 3Hp)
    w_out = params["w_out"]                                                  # (H, H + E)
    woh_t = jnp.zeros((Hp, Hp), jnp.float32).at[:H, :H].set(w_out[:, :H].T)  # (Hp, Hp)
    woe_t = jnp.zeros((E, Hp), jnp.float32).at[:, :H].set(w_out[:, H:].T)    # (E, Hp)
    bo = jnp.zeros((1, Hp), jnp.float32).at[0, :H].set(params["b_out"])      # (1, Hp)

    grid = (b_pad // b_tile,)
    in_specs = [
        pl.BlockSpec((T, b_tile, F), lambda b: (0, b, 0)),   # x (batch-tiled)
        pl.BlockSpec((b_tile, E), lambda b: (b, 0)),         # embeds (batch-tiled)
        pl.BlockSpec((F, 3 * Hp), lambda b: (0, 0)),         # weights: resident
        pl.BlockSpec((Hp, 3 * Hp), lambda b: (0, 0)),
        pl.BlockSpec((1, 3 * Hp), lambda b: (0, 0)),
        pl.BlockSpec((1, 3 * Hp), lambda b: (0, 0)),
        pl.BlockSpec((Hp, Hp), lambda b: (0, 0)),
        pl.BlockSpec((E, Hp), lambda b: (0, 0)),
        pl.BlockSpec((1, Hp), lambda b: (0, 0)),
    ]
    out_specs = (
        pl.BlockSpec((T, b_tile, Hp), lambda b: (0, b, 0)),  # gru_out (time-major)
        pl.BlockSpec((b_tile, Hp), lambda b: (b, 0)),        # encoder_concat_hidden
    )

    gru_out_tm, enc_pad = pl.pallas_call(
        _rnn_concat_kernel,
        grid=grid,
        in_specs=in_specs,
        out_specs=out_specs,
        out_shape=(
            jax.ShapeDtypeStruct((T, b_pad, Hp), jnp.float32),
            jax.ShapeDtypeStruct((b_pad, Hp), jnp.float32),
        ),
        scratch_shapes=[pltpu.VMEM((T * b_tile, 3 * Hp), jnp.float32)],
        compiler_params=pltpu.CompilerParams(
            dimension_semantics=("parallel",),               # shard batch across TCs (v7x)
            vmem_limit_bytes=64 * 1024 * 1024,
        ),
    )(x_tm, embeds_p, wih_t, whh_t, bih, bhh, woh_t, woe_t, bo)

    gru_out = jnp.transpose(gru_out_tm, (1, 0, 2))[:B, :, :H]   # (B, T, H) batch-first
    enc = enc_pad[:B, :H]                                       # (B, H)
    return gru_out, enc


# ----------------------------------------------------------------------------
# Pure-JAX reference (for correctness check)
# ----------------------------------------------------------------------------
def _reference_forward(input_seq, input_cat, params):
    if input_seq.ndim < 3:
        input_seq = input_seq[:, :, None]
    embeds = jnp.concatenate(
        [tbl[input_cat[:, i]] for i, tbl in enumerate(params["embed_tables"])],
        axis=1,
    )
    H = params["w_hh"].shape[1]
    w_ih, w_hh = params["w_ih"], params["w_hh"]
    b_ih, b_hh = params["b_ih"], params["b_hh"]
    B = input_seq.shape[0]

    def step(h, x_t):
        gx = x_t @ w_ih.T + b_ih
        gh = h @ w_hh.T + b_hh
        r = jax.nn.sigmoid(gx[:, :H] + gh[:, :H])
        z = jax.nn.sigmoid(gx[:, H:2 * H] + gh[:, H:2 * H])
        n = jnp.tanh(gx[:, 2 * H:] + r * gh[:, 2 * H:])
        h_new = (1.0 - z) * n + z * h
        return h_new, h_new

    h0 = jnp.zeros((B, H), jnp.float32)
    h_final, outs = lax.scan(step, h0, jnp.transpose(input_seq, (1, 0, 2)))
    gru_out = jnp.transpose(outs, (1, 0, 2))
    enc = jnp.concatenate([h_final, embeds], axis=1) @ params["w_out"].T + params["b_out"]
    return gru_out, enc


# ----------------------------------------------------------------------------
# Deterministic parameter construction
# ----------------------------------------------------------------------------
def init_params(key, embed_sizes, input_feature_len, hidden_size):
    ks = jax.random.split(key, 8 + len(embed_sizes))
    H, F = hidden_size, input_feature_len
    E = sum(s[1] for s in embed_sizes)

    embed_tables = [
        jax.random.normal(ks[i], (nc, out), dtype=jnp.float32)
        for i, (nc, out) in enumerate(embed_sizes)
    ]
    kg = 1.0 / np.sqrt(H)
    kl = 1.0 / np.sqrt(H + E)
    i0 = len(embed_sizes)
    params = {
        "embed_tables": embed_tables,
        "w_ih": jax.random.uniform(ks[i0 + 0], (3 * H, F), jnp.float32, -kg, kg),
        "w_hh": jax.random.uniform(ks[i0 + 1], (3 * H, H), jnp.float32, -kg, kg),
        "b_ih": jax.random.uniform(ks[i0 + 2], (3 * H,), jnp.float32, -kg, kg),
        "b_hh": jax.random.uniform(ks[i0 + 3], (3 * H,), jnp.float32, -kg, kg),
        "w_out": jax.random.uniform(ks[i0 + 4], (H, H + E), jnp.float32, -kl, kl),
        "b_out": jax.random.uniform(ks[i0 + 5], (H,), jnp.float32, -kl, kl),
    }
    return params


# ----------------------------------------------------------------------------
# Demo
# ----------------------------------------------------------------------------
if __name__ == "__main__":
    B, T, F, H = 2, 8, 4, 32
    embed_sizes = [(5, 3), (7, 4)]

    key = jax.random.PRNGKey(0)
    k_par, k_seq, k_cat = jax.random.split(key, 3)

    params = init_params(k_par, embed_sizes, input_feature_len=F, hidden_size=H)
    input_seq = jax.random.normal(k_seq, (B, T, F), dtype=jnp.float32)
    input_cat = jnp.stack(
        [
            jax.random.randint(jax.random.fold_in(k_cat, i), (B,), 0, nc)
            for i, (nc, _) in enumerate(embed_sizes)
        ],
        axis=1,
    ).astype(jnp.int32)

    fwd = jax.jit(functools.partial(rnn_concat_encoder_forward, params=params))
    gru_out, enc_hidden = fwd(input_seq, input_cat)
    jax.block_until_ready((gru_out, enc_hidden))

    # correctness check vs pure-JAX reference
    ref_gru_out, ref_enc = _reference_forward(input_seq, input_cat, params)
    np.testing.assert_allclose(np.asarray(gru_out), np.asarray(ref_gru_out),
                               rtol=1e-4, atol=1e-4)
    np.testing.assert_allclose(np.asarray(enc_hidden), np.asarray(ref_enc),
                               rtol=1e-4, atol=1e-4)
    assert gru_out.shape == (B, T, H) and enc_hidden.shape == (B, H)

    print("KERNEL_OK")
</pallas_src>

<mosaic_0001>
module attributes {stable_mosaic.version = 11 : i64} {
  func.func @_rnn_concat_kernel(%arg0: i32, %arg1: memref<8x8x4xf32, #tpu.memory_space<vmem>>, %arg2: memref<8x7xf32, #tpu.memory_space<vmem>>, %arg3: memref<4x384xf32, #tpu.memory_space<vmem>>, %arg4: memref<128x384xf32, #tpu.memory_space<vmem>>, %arg5: memref<1x384xf32, #tpu.memory_space<vmem>>, %arg6: memref<1x384xf32, #tpu.memory_space<vmem>>, %arg7: memref<128x128xf32, #tpu.memory_space<vmem>>, %arg8: memref<7x128xf32, #tpu.memory_space<vmem>>, %arg9: memref<1x128xf32, #tpu.memory_space<vmem>>, %arg10: memref<8x8x128xf32, #tpu.memory_space<vmem>>, %arg11: memref<8x128xf32, #tpu.memory_space<vmem>>, %arg12: memref<64x384xf32, #tpu.memory_space<vmem>>) attributes {dimension_semantics = [#tpu.dimension_semantics<parallel>], iteration_bounds = array<i64: 1>, scalar_prefetch = 0 : i64, scratch_operands = 1 : i64, tpu.core_type = #tpu.core_type<tc>, window_params = [{transform_indices = @transform_0, window_bounds = array<i64: 8, 8, 4>}, {transform_indices = @transform_1, window_bounds = array<i64: 8, 7>}, {pipeline_mode = #tpu.pipeline_mode<synchronous>, transform_indices = @transform_2, window_bounds = array<i64: 4, 384>}, {pipeline_mode = #tpu.pipeline_mode<synchronous>, transform_indices = @transform_3, window_bounds = array<i64: 128, 384>}, {pipeline_mode = #tpu.pipeline_mode<synchronous>, transform_indices = @transform_4, window_bounds = array<i64: 1, 384>}, {pipeline_mode = #tpu.pipeline_mode<synchronous>, transform_indices = @transform_5, window_bounds = array<i64: 1, 384>}, {pipeline_mode = #tpu.pipeline_mode<synchronous>, transform_indices = @transform_6, window_bounds = array<i64: 128, 128>}, {pipeline_mode = #tpu.pipeline_mode<synchronous>, transform_indices = @transform_7, window_bounds = array<i64: 7, 128>}, {pipeline_mode = #tpu.pipeline_mode<synchronous>, transform_indices = @transform_8, window_bounds = array<i64: 1, 128>}, {transform_indices = @transform_9, window_bounds = array<i64: 8, 8, 128>}, {transform_indices = @transform_10, window_bounds = array<i64: 8, 128>}]} {
    %c0 = arith.constant 0 : index
    %c0_0 = arith.constant 0 : index
    %c0_1 = arith.constant 0 : index
    %0 = vector.load %arg1[%c0, %c0_0, %c0_1] : memref<8x8x4xf32, #tpu.memory_space<vmem>>, vector<8x8x4xf32>
    %1 = vector.shape_cast %0 : vector<8x8x4xf32> to vector<64x4xf32>
    %c0_2 = arith.constant 0 : index
    %c0_3 = arith.constant 0 : index
    %2 = vector.load %arg3[%c0_2, %c0_3] : memref<4x384xf32, #tpu.memory_space<vmem>>, vector<4x384xf32>
    %cst = arith.constant dense<0.000000e+00> : vector<64x384xf32>
    %3 = tpu.matmul %1, %2, %cst {dimension_numbers = #tpu.dot_dimension_numbers<[1], [0], [0], [1], [0, 0, 1, 1], [], []>} : vector<64x4xf32>, vector<4x384xf32>, vector<64x384xf32> -> vector<64x384xf32>
    %c0_4 = arith.constant 0 : index
    %c0_5 = arith.constant 0 : index
    %4 = vector.load %arg5[%c0_4, %c0_5] : memref<1x384xf32, #tpu.memory_space<vmem>>, vector<1x384xf32>
    %5 = vector.broadcast %4 : vector<1x384xf32> to vector<64x384xf32>
    %6 = arith.addf %3, %5 : vector<64x384xf32>
    %c0_6 = arith.constant 0 : index
    %c0_7 = arith.constant 0 : index
    %7 = vector.load %arg12[%c0_6, %c0_7] : memref<64x384xf32, #tpu.memory_space<vmem>>, vector<64x384xf32>
    tpu.vector_store %arg12[%c0_6, %c0_7], %6 {strides = array<i32>} : memref<64x384xf32, #tpu.memory_space<vmem>>, vector<64x384xf32>,
    %c0_8 = arith.constant 0 : index
    %c0_9 = arith.constant 0 : index
    %8 = vector.load %arg4[%c0_8, %c0_9] : memref<128x384xf32, #tpu.memory_space<vmem>>, vector<128x384xf32>
    %c0_10 = arith.constant 0 : index
    %c0_11 = arith.constant 0 : index
    %9 = vector.load %arg6[%c0_10, %c0_11] : memref<1x384xf32, #tpu.memory_space<vmem>>, vector<1x384xf32>
    %10 = vector.shape_cast %9 : vector<1x384xf32> to vector<1x384xf32>
    %11 = vector.broadcast %10 : vector<1x384xf32> to vector<8x384xf32>
    %cst_12 = arith.constant 0.000000e+00 : f32
    %12 = vector.broadcast %cst_12 : f32 to vector<8x128xf32>
    %c0_i32 = arith.constant 0 : i32
    %c8_i32 = arith.constant 8 : i32
    %13 = arith.muli %c0_i32, %c8_i32 : i32
    %14 = tpu.assume_multiple %13, 8 : i32
    %15 = arith.index_cast %14 : i32 to index
    %c0_13 = arith.constant 0 : index
    %16 = vector.load %arg12[%15, %c0_13] : memref<64x384xf32, #tpu.memory_space<vmem>>, vector<8x384xf32>
    %cst_14 = arith.constant dense<0.000000e+00> : vector<8x384xf32>
    %17 = tpu.matmul %12, %8, %cst_14 {dimension_numbers = #tpu.dot_dimension_numbers<[1], [0], [0], [1], [0, 0, 1, 1], [], []>} : vector<8x128xf32>, vector<128x384xf32>, vector<8x384xf32> -> vector<8x384xf32>
    %18 = arith.addf %17, %11 : vector<8x384xf32>
    %19 = vector.extract_strided_slice %16 {offsets = [0, 0], sizes = [8, 128], strides = [1, 1]} : vector<8x384xf32> to vector<8x128xf32>
    %20 = vector.extract_strided_slice %18 {offsets = [0, 0], sizes = [8, 128], strides = [1, 1]} : vector<8x384xf32> to vector<8x128xf32>
    %21 = arith.addf %19, %20 : vector<8x128xf32>
    %22 = arith.negf %21 : vector<8x128xf32>
    %23 = math.exp %22 : vector<8x128xf32>
    %cst_15 = arith.constant 1.000000e+00 : f32
    %24 = vector.broadcast %cst_15 : f32 to vector<8x128xf32>
    %25 = arith.addf %24, %23 : vector<8x128xf32>
    %26 = arith.divf %24, %25 : vector<8x128xf32>
    %27 = vector.extract_strided_slice %16 {offsets = [0, 128], sizes = [8, 128], strides = [1, 1]} : vector<8x384xf32> to vector<8x128xf32>
    %28 = vector.extract_strided_slice %18 {offsets = [0, 128], sizes = [8, 128], strides = [1, 1]} : vector<8x384xf32> to vector<8x128xf32>
    %29 = arith.addf %27, %28 : vector<8x128xf32>
    %30 = arith.negf %29 : vector<8x128xf32>
    %31 = math.exp %30 : vector<8x128xf32>
    %cst_16 = arith.constant 1.000000e+00 : f32
    %32 = vector.broadcast %cst_16 : f32 to vector<8x128xf32>
    %33 = arith.addf %32, %31 : vector<8x128xf32>
    %34 = arith.divf %32, %33 : vector<8x128xf32>
    %35 = vector.extract_strided_slice %16 {offsets = [0, 256], sizes = [8, 128], strides = [1, 1]} : vector<8x384xf32> to vector<8x128xf32>
    %36 = vector.extract_strided_slice %18 {offsets = [0, 256], sizes = [8, 128], strides = [1, 1]} : vector<8x384xf32> to vector<8x128xf32>
    %37 = arith.mulf %26, %36 : vector<8x128xf32>
    %38 = arith.addf %35, %37 : vector<8x128xf32>
    %39 = math.tanh %38 : vector<8x128xf32>
    %cst_17 = arith.constant 1.000000e+00 : f32
    %40 = vector.broadcast %cst_17 : f32 to vector<8x128xf32>
    %41 = arith.subf %40, %34 : vector<8x128xf32>
    %42 = arith.mulf %41, %39 : vector<8x128xf32>
    %43 = arith.mulf %34, %12 : vector<8x128xf32>
    %44 = arith.addf %42, %43 : vector<8x128xf32>
    %45 = arith.index_cast %c0_i32 : i32 to index
    %c0_18 = arith.constant 0 : index
    %c0_19 = arith.constant 0 : index
    %46 = vector.load %arg10[%45, %c0_18, %c0_19] : memref<8x8x128xf32, #tpu.memory_space<vmem>>, vector<1x8x128xf32>
    %47 = vector.shape_cast %46 : vector<1x8x128xf32> to vector<8x128xf32>
    %48 = vector.shape_cast %44 : vector<8x128xf32> to vector<1x8x128xf32>
    tpu.vector_store %arg10[%45, %c0_18, %c0_19], %48 {strides = array<i32>} : memref<8x8x128xf32, #tpu.memory_space<vmem>>, vector<1x8x128xf32>,
    %c1_i32 = arith.constant 1 : i32
    %c8_i32_20 = arith.constant 8 : i32
    %49 = arith.muli %c1_i32, %c8_i32_20 : i32
    %50 = tpu.assume_multiple %49, 8 : i32
    %51 = arith.index_cast %50 : i32 to index
    %c0_21 = arith.constant 0 : index
    %52 = vector.load %arg12[%51, %c0_21] : memref<64x384xf32, #tpu.memory_space<vmem>>, vector<8x384xf32>
    %cst_22 = arith.constant dense<0.000000e+00> : vector<8x384xf32>
    %53 = tpu.matmul %44, %8, %cst_22 {dimension_numbers = #tpu.dot_dimension_numbers<[1], [0], [0], [1], [0, 0, 1, 1], [], []>} : vector<8x128xf32>, vector<128x384xf32>, vector<8x384xf32> -> vector<8x384xf32>
    %54 = arith.addf %53, %11 : vector<8x384xf32>
    %55 = vector.extract_strided_slice %52 {offsets = [0, 0], sizes = [8, 128], strides = [1, 1]} : vector<8x384xf32> to vector<8x128xf32>
    %56 = vector.extract_strided_slice %54 {offsets = [0, 0], sizes = [8, 128], strides = [1, 1]} : vector<8x384xf32> to vector<8x128xf32>
    %57 = arith.addf %55, %56 : vector<8x128xf32>
    %58 = arith.negf %57 : vector<8x128xf32>
    %59 = math.exp %58 : vector<8x128xf32>
    %cst_23 = arith.constant 1.000000e+00 : f32
    %60 = vector.broadcast %cst_23 : f32 to vector<8x128xf32>
    %61 = arith.addf %60, %59 : vector<8x128xf32>
    %62 = arith.divf %60, %61 : vector<8x128xf32>
    %63 = vector.extract_strided_slice %52 {offsets = [0, 128], sizes = [8, 128], strides = [1, 1]} : vector<8x384xf32> to vector<8x128xf32>
    %64 = vector.extract_strided_slice %54 {offsets = [0, 128], sizes = [8, 128], strides = [1, 1]} : vector<8x384xf32> to vector<8x128xf32>
    %65 = arith.addf %63, %64 : vector<8x128xf32>
    %66 = arith.negf %65 : vector<8x128xf32>
    %67 = math.exp %66 : vector<8x128xf32>
    %cst_24 = arith.constant 1.000000e+00 : f32
    %68 = vector.broadcast %cst_24 : f32 to vector<8x128xf32>
    %69 = arith.addf %68, %67 : vector<8x128xf32>
    %70 = arith.divf %68, %69 : vector<8x128xf32>
    %71 = vector.extract_strided_slice %52 {offsets = [0, 256], sizes = [8, 128], strides = [1, 1]} : vector<8x384xf32> to vector<8x128xf32>
    %72 = vector.extract_strided_slice %54 {offsets = [0, 256], sizes = [8, 128], strides = [1, 1]} : vector<8x384xf32> to vector<8x128xf32>
    %73 = arith.mulf %62, %72 : vector<8x128xf32>
    %74 = arith.addf %71, %73 : vector<8x128xf32>
    %75 = math.tanh %74 : vector<8x128xf32>
    %cst_25 = arith.constant 1.000000e+00 : f32
    %76 = vector.broadcast %cst_25 : f32 to vector<8x128xf32>
    %77 = arith.subf %76, %70 : vector<8x128xf32>
    %78 = arith.mulf %77, %75 : vector<8x128xf32>
    %79 = arith.mulf %70, %44 : vector<8x128xf32>
    %80 = arith.addf %78, %79 : vector<8x128xf32>
    %81 = arith.index_cast %c1_i32 : i32 to index
    %c0_26 = arith.constant 0 : index
    %c0_27 = arith.constant 0 : index
    %82 = vector.load %arg10[%81, %c0_26, %c0_27] : memref<8x8x128xf32, #tpu.memory_space<vmem>>, vector<1x8x128xf32>
    %83 = vector.shape_cast %82 : vector<1x8x128xf32> to vector<8x128xf32>
    %84 = vector.shape_cast %80 : vector<8x128xf32> to vector<1x8x128xf32>
    tpu.vector_store %arg10[%81, %c0_26, %c0_27], %84 {strides = array<i32>} : memref<8x8x128xf32, #tpu.memory_space<vmem>>, vector<1x8x128xf32>,
    %c2_i32 = arith.constant 2 : i32
    %c8_i32_28 = arith.constant 8 : i32
    %85 = arith.muli %c2_i32, %c8_i32_28 : i32
    %86 = tpu.assume_multiple %85, 8 : i32
    %87 = arith.index_cast %86 : i32 to index
    %c0_29 = arith.constant 0 : index
    %88 = vector.load %arg12[%87, %c0_29] : memref<64x384xf32, #tpu.memory_space<vmem>>, vector<8x384xf32>
    %cst_30 = arith.constant dense<0.000000e+00> : vector<8x384xf32>
    %89 = tpu.matmul %80, %8, %cst_30 {dimension_numbers = #tpu.dot_dimension_numbers<[1], [0], [0], [1], [0, 0, 1, 1], [], []>} : vector<8x128xf32>, vector<128x384xf32>, vector<8x384xf32> -> vector<8x384xf32>
    %90 = arith.addf %89, %11 : vector<8x384xf32>
    %91 = vector.extract_strided_slice %88 {offsets = [0, 0], sizes = [8, 128], strides = [1, 1]} : vector<8x384xf32> to vector<8x128xf32>
    %92 = vector.extract_strided_slice %90 {offsets = [0, 0], sizes = [8, 128], strides = [1, 1]} : vector<8x384xf32> to vector<8x128xf32>
    %93 = arith.addf %91, %92 : vector<8x128xf32>
    %94 = arith.negf %93 : vector<8x128xf32>
    %95 = math.exp %94 : vector<8x128xf32>
    %cst_31 = arith.constant 1.000000e+00 : f32
    %96 = vector.broadcast %cst_31 : f32 to vector<8x128xf32>
    %97 = arith.addf %96, %95 : vector<8x128xf32>
    %98 = arith.divf %96, %97 : vector<8x128xf32>
    %99 = vector.extract_strided_slice %88 {offsets = [0, 128], sizes = [8, 128], strides = [1, 1]} : vector<8x384xf32> to vector<8x128xf32>
    %100 = vector.extract_strided_slice %90 {offsets = [0, 128], sizes = [8, 128], strides = [1, 1]} : vector<8x384xf32> to vector<8x128xf32>
    %101 = arith.addf %99, %100 : vector<8x128xf32>
    %102 = arith.negf %101 : vector<8x128xf32>
    %103 = math.exp %102 : vector<8x128xf32>
    %cst_32 = arith.constant 1.000000e+00 : f32
    %104 = vector.broadcast %cst_32 : f32 to vector<8x128xf32>
    %105 = arith.addf %104, %103 : vector<8x128xf32>
    %106 = arith.divf %104, %105 : vector<8x128xf32>
    %107 = vector.extract_strided_slice %88 {offsets = [0, 256], sizes = [8, 128], strides = [1, 1]} : vector<8x384xf32> to vector<8x128xf32>
    %108 = vector.extract_strided_slice %90 {offsets = [0, 256], sizes = [8, 128], strides = [1, 1]} : vector<8x384xf32> to vector<8x128xf32>
    %109 = arith.mulf %98, %108 : vector<8x128xf32>
    %110 = arith.addf %107, %109 : vector<8x128xf32>
    %111 = math.tanh %110 : vector<8x128xf32>
    %cst_33 = arith.constant 1.000000e+00 : f32
    %112 = vector.broadcast %cst_33 : f32 to vector<8x128xf32>
    %113 = arith.subf %112, %106 : vector<8x128xf32>
    %114 = arith.mulf %113, %111 : vector<8x128xf32>
    %115 = arith.mulf %106, %80 : vector<8x128xf32>
    %116 = arith.addf %114, %115 : vector<8x128xf32>
    %117 = arith.index_cast %c2_i32 : i32 to index
    %c0_34 = arith.constant 0 : index
    %c0_35 = arith.constant 0 : index
    %118 = vector.load %arg10[%117, %c0_34, %c0_35] : memref<8x8x128xf32, #tpu.memory_space<vmem>>, vector<1x8x128xf32>
    %119 = vector.shape_cast %118 : vector<1x8x128xf32> to vector<8x128xf32>
    %120 = vector.shape_cast %116 : vector<8x128xf32> to vector<1x8x128xf32>
    tpu.vector_store %arg10[%117, %c0_34, %c0_35], %120 {strides = array<i32>} : memref<8x8x128xf32, #tpu.memory_space<vmem>>, vector<1x8x128xf32>,
    %c3_i32 = arith.constant 3 : i32
    %c8_i32_36 = arith.constant 8 : i32
    %121 = arith.muli %c3_i32, %c8_i32_36 : i32
    %122 = tpu.assume_multiple %121, 8 : i32
    %123 = arith.index_cast %122 : i32 to index
    %c0_37 = arith.constant 0 : index
    %124 = vector.load %arg12[%123, %c0_37] : memref<64x384xf32, #tpu.memory_space<vmem>>, vector<8x384xf32>
    %cst_38 = arith.constant dense<0.000000e+00> : vector<8x384xf32>
    %125 = tpu.matmul %116, %8, %cst_38 {dimension_numbers = #tpu.dot_dimension_numbers<[1], [0], [0], [1], [0, 0, 1, 1], [], []>} : vector<8x128xf32>, vector<128x384xf32>, vector<8x384xf32> -> vector<8x384xf32>
    %126 = arith.addf %125, %11 : vector<8x384xf32>
    %127 = vector.extract_strided_slice %124 {offsets = [0, 0], sizes = [8, 128], strides = [1, 1]} : vector<8x384xf32> to vector<8x128xf32>
    %128 = vector.extract_strided_slice %126 {offsets = [0, 0], sizes = [8, 128], strides = [1, 1]} : vector<8x384xf32> to vector<8x128xf32>
    %129 = arith.addf %127, %128 : vector<8x128xf32>
    %130 = arith.negf %129 : vector<8x128xf32>
    %131 = math.exp %130 : vector<8x128xf32>
    %cst_39 = arith.constant 1.000000e+00 : f32
    %132 = vector.broadcast %cst_39 : f32 to vector<8x128xf32>
    %133 = arith.addf %132, %131 : vector<8x128xf32>
    %134 = arith.divf %132, %133 : vector<8x128xf32>
    %135 = vector.extract_strided_slice %124 {offsets = [0, 128], sizes = [8, 128], strides = [1, 1]} : vector<8x384xf32> to vector<8x128xf32>
    %136 = vector.extract_strided_slice %126 {offsets = [0, 128], sizes = [8, 128], strides = [1, 1]} : vector<8x384xf32> to vector<8x128xf32>
    %137 = arith.addf %135, %136 : vector<8x128xf32>
    %138 = arith.negf %137 : vector<8x128xf32>
    %139 = math.exp %138 : vector<8x128xf32>
    %cst_40 = arith.constant 1.000000e+00 : f32
    %140 = vector.broadcast %cst_40 : f32 to vector<8x128xf32>
    %141 = arith.addf %140, %139 : vector<8x128xf32>
    %142 = arith.divf %140, %141 : vector<8x128xf32>
    %143 = vector.extract_strided_slice %124 {offsets = [0, 256], sizes = [8, 128], strides = [1, 1]} : vector<8x384xf32> to vector<8x128xf32>
    %144 = vector.extract_strided_slice %126 {offsets = [0, 256], sizes = [8, 128], strides = [1, 1]} : vector<8x384xf32> to vector<8x128xf32>
    %145 = arith.mulf %134, %144 : vector<8x128xf32>
    %146 = arith.addf %143, %145 : vector<8x128xf32>
    %147 = math.tanh %146 : vector<8x128xf32>
    %cst_41 = arith.constant 1.000000e+00 : f32
    %148 = vector.broadcast %cst_41 : f32 to vector<8x128xf32>
    %149 = arith.subf %148, %142 : vector<8x128xf32>
    %150 = arith.mulf %149, %147 : vector<8x128xf32>
    %151 = arith.mulf %142, %116 : vector<8x128xf32>
    %152 = arith.addf %150, %151 : vector<8x128xf32>
    %153 = arith.index_cast %c3_i32 : i32 to index
    %c0_42 = arith.constant 0 : index
    %c0_43 = arith.constant 0 : index
    %154 = vector.load %arg10[%153, %c0_42, %c0_43] : memref<8x8x128xf32, #tpu.memory_space<vmem>>, vector<1x8x128xf32>
    %155 = vector.shape_cast %154 : vector<1x8x128xf32> to vector<8x128xf32>
    %156 = vector.shape_cast %152 : vector<8x128xf32> to vector<1x8x128xf32>
    tpu.vector_store %arg10[%153, %c0_42, %c0_43], %156 {strides = array<i32>} : memref<8x8x128xf32, #tpu.memory_space<vmem>>, vector<1x8x128xf32>,
    %c4_i32 = arith.constant 4 : i32
    %c8_i32_44 = arith.constant 8 : i32
    %157 = arith.muli %c4_i32, %c8_i32_44 : i32
    %158 = tpu.assume_multiple %157, 8 : i32
    %159 = arith.index_cast %158 : i32 to index
    %c0_45 = arith.constant 0 : index
    %160 = vector.load %arg12[%159, %c0_45] : memref<64x384xf32, #tpu.memory_space<vmem>>, vector<8x384xf32>
    %cst_46 = arith.constant dense<0.000000e+00> : vector<8x384xf32>
    %161 = tpu.matmul %152, %8, %cst_46 {dimension_numbers = #tpu.dot_dimension_numbers<[1], [0], [0], [1], [0, 0, 1, 1], [], []>} : vector<8x128xf32>, vector<128x384xf32>, vector<8x384xf32> -> vector<8x384xf32>
    %162 = arith.addf %161, %11 : vector<8x384xf32>
    %163 = vector.extract_strided_slice %160 {offsets = [0, 0], sizes = [8, 128], strides = [1, 1]} : vector<8x384xf32> to vector<8x128xf32>
    %164 = vector.extract_strided_slice %162 {offsets = [0, 0], sizes = [8, 128], strides = [1, 1]} : vector<8x384xf32> to vector<8x128xf32>
    %165 = arith.addf %163, %164 : vector<8x128xf32>
    %166 = arith.negf %165 : vector<8x128xf32>
    %167 = math.exp %166 : vector<8x128xf32>
    %cst_47 = arith.constant 1.000000e+00 : f32
    %168 = vector.broadcast %cst_47 : f32 to vector<8x128xf32>
    %169 = arith.addf %168, %167 : vector<8x128xf32>
    %170 = arith.divf %168, %169 : vector<8x128xf32>
    %171 = vector.extract_strided_slice %160 {offsets = [0, 128], sizes = [8, 128], strides = [1, 1]} : vector<8x384xf32> to vector<8x128xf32>
    %172 = vector.extract_strided_slice %162 {offsets = [0, 128], sizes = [8, 128], strides = [1, 1]} : vector<8x384xf32> to vector<8x128xf32>
    %173 = arith.addf %171, %172 : vector<8x128xf32>
    %174 = arith.negf %173 : vector<8x128xf32>
    %175 = math.exp %174 : vector<8x128xf32>
    %cst_48 = arith.constant 1.000000e+00 : f32
    %176 = vector.broadcast %cst_48 : f32 to vector<8x128xf32>
    %177 = arith.addf %176, %175 : vector<8x128xf32>
    %178 = arith.divf %176, %177 : vector<8x128xf32>
    %179 = vector.extract_strided_slice %160 {offsets = [0, 256], sizes = [8, 128], strides = [1, 1]} : vector<8x384xf32> to vector<8x128xf32>
    %180 = vector.extract_strided_slice %162 {offsets = [0, 256], sizes = [8, 128], strides = [1, 1]} : vector<8x384xf32> to vector<8x128xf32>
    %181 = arith.mulf %170, %180 : vector<8x128xf32>
    %182 = arith.addf %179, %181 : vector<8x128xf32>
    %183 = math.tanh %182 : vector<8x128xf32>
    %cst_49 = arith.constant 1.000000e+00 : f32
    %184 = vector.broadcast %cst_49 : f32 to vector<8x128xf32>
    %185 = arith.subf %184, %178 : vector<8x128xf32>
    %186 = arith.mulf %185, %183 : vector<8x128xf32>
    %187 = arith.mulf %178, %152 : vector<8x128xf32>
    %188 = arith.addf %186, %187 : vector<8x128xf32>
    %189 = arith.index_cast %c4_i32 : i32 to index
    %c0_50 = arith.constant 0 : index
    %c0_51 = arith.constant 0 : index
    %190 = vector.load %arg10[%189, %c0_50, %c0_51] : memref<8x8x128xf32, #tpu.memory_space<vmem>>, vector<1x8x128xf32>
    %191 = vector.shape_cast %190 : vector<1x8x128xf32> to vector<8x128xf32>
    %192 = vector.shape_cast %188 : vector<8x128xf32> to vector<1x8x128xf32>
    tpu.vector_store %arg10[%189, %c0_50, %c0_51], %192 {strides = array<i32>} : memref<8x8x128xf32, #tpu.memory_space<vmem>>, vector<1x8x128xf32>,
    %c5_i32 = arith.constant 5 : i32
    %c8_i32_52 = arith.constant 8 : i32
    %193 = arith.muli %c5_i32, %c8_i32_52 : i32
    %194 = tpu.assume_multiple %193, 8 : i32
    %195 = arith.index_cast %194 : i32 to index
    %c0_53 = arith.constant 0 : index
    %196 = vector.load %arg12[%195, %c0_53] : memref<64x384xf32, #tpu.memory_space<vmem>>, vector<8x384xf32>
    %cst_54 = arith.constant dense<0.000000e+00> : vector<8x384xf32>
    %197 = tpu.matmul %188, %8, %cst_54 {dimension_numbers = #tpu.dot_dimension_numbers<[1], [0], [0], [1], [0, 0, 1, 1], [], []>} : vector<8x128xf32>, vector<128x384xf32>, vector<8x384xf32> -> vector<8x384xf32>
    %198 = arith.addf %197, %11 : vector<8x384xf32>
    %199 = vector.extract_strided_slice %196 {offsets = [0, 0], sizes = [8, 128], strides = [1, 1]} : vector<8x384xf32> to vector<8x128xf32>
    %200 = vector.extract_strided_slice %198 {offsets = [0, 0], sizes = [8, 128], strides = [1, 1]} : vector<8x384xf32> to vector<8x128xf32>
    %201 = arith.addf %199, %200 : vector<8x128xf32>
    %202 = arith.negf %201 : vector<8x128xf32>
    %203 = math.exp %202 : vector<8x128xf32>
    %cst_55 = arith.constant 1.000000e+00 : f32
    %204 = vector.broadcast %cst_55 : f32 to vector<8x128xf32>
    %205 = arith.addf %204, %203 : vector<8x128xf32>
    %206 = arith.divf %204, %205 : vector<8x128xf32>
    %207 = vector.extract_strided_slice %196 {offsets = [0, 128], sizes = [8, 128], strides = [1, 1]} : vector<8x384xf32> to vector<8x128xf32>
    %208 = vector.extract_strided_slice %198 {offsets = [0, 128], sizes = [8, 128], strides = [1, 1]} : vector<8x384xf32> to vector<8x128xf32>
    %209 = arith.addf %207, %208 : vector<8x128xf32>
    %210 = arith.negf %209 : vector<8x128xf32>
    %211 = math.exp %210 : vector<8x128xf32>
    %cst_56 = arith.constant 1.000000e+00 : f32
    %212 = vector.broadcast %cst_56 : f32 to vector<8x128xf32>
    %213 = arith.addf %212, %211 : vector<8x128xf32>
    %214 = arith.divf %212, %213 : vector<8x128xf32>
    %215 = vector.extract_strided_slice %196 {offsets = [0, 256], sizes = [8, 128], strides = [1, 1]} : vector<8x384xf32> to vector<8x128xf32>
    %216 = vector.extract_strided_slice %198 {offsets = [0, 256], sizes = [8, 128], strides = [1, 1]} : vector<8x384xf32> to vector<8x128xf32>
    %217 = arith.mulf %206, %216 : vector<8x128xf32>
    %218 = arith.addf %215, %217 : vector<8x128xf32>
    %219 = math.tanh %218 : vector<8x128xf32>
    %cst_57 = arith.constant 1.000000e+00 : f32
    %220 = vector.broadcast %cst_57 : f32 to vector<8x128xf32>
    %221 = arith.subf %220, %214 : vector<8x128xf32>
    %222 = arith.mulf %221, %219 : vector<8x128xf32>
    %223 = arith.mulf %214, %188 : vector<8x128xf32>
    %224 = arith.addf %222, %223 : vector<8x128xf32>
    %225 = arith.index_cast %c5_i32 : i32 to index
    %c0_58 = arith.constant 0 : index
    %c0_59 = arith.constant 0 : index
    %226 = vector.load %arg10[%225, %c0_58, %c0_59] : memref<8x8x128xf32, #tpu.memory_space<vmem>>, vector<1x8x128xf32>
    %227 = vector.shape_cast %226 : vector<1x8x128xf32> to vector<8x128xf32>
    %228 = vector.shape_cast %224 : vector<8x128xf32> to vector<1x8x128xf32>
    tpu.vector_store %arg10[%225, %c0_58, %c0_59], %228 {strides = array<i32>} : memref<8x8x128xf32, #tpu.memory_space<vmem>>, vector<1x8x128xf32>,
    %c6_i32 = arith.constant 6 : i32
    %c8_i32_60 = arith.constant 8 : i32
    %229 = arith.muli %c6_i32, %c8_i32_60 : i32
    %230 = tpu.assume_multiple %229, 8 : i32
    %231 = arith.index_cast %230 : i32 to index
    %c0_61 = arith.constant 0 : index
    %232 = vector.load %arg12[%231, %c0_61] : memref<64x384xf32, #tpu.memory_space<vmem>>, vector<8x384xf32>
    %cst_62 = arith.constant dense<0.000000e+00> : vector<8x384xf32>
    %233 = tpu.matmul %224, %8, %cst_62 {dimension_numbers = #tpu.dot_dimension_numbers<[1], [0], [0], [1], [0, 0, 1, 1], [], []>} : vector<8x128xf32>, vector<128x384xf32>, vector<8x384xf32> -> vector<8x384xf32>
    %234 = arith.addf %233, %11 : vector<8x384xf32>
    %235 = vector.extract_strided_slice %232 {offsets = [0, 0], sizes = [8, 128], strides = [1, 1]} : vector<8x384xf32> to vector<8x128xf32>
    %236 = vector.extract_strided_slice %234 {offsets = [0, 0], sizes = [8, 128], strides = [1, 1]} : vector<8x384xf32> to vector<8x128xf32>
    %237 = arith.addf %235, %236 : vector<8x128xf32>
    %238 = arith.negf %237 : vector<8x128xf32>
    %239 = math.exp %238 : vector<8x128xf32>
    %cst_63 = arith.constant 1.000000e+00 : f32
    %240 = vector.broadcast %cst_63 : f32 to vector<8x128xf32>
    %241 = arith.addf %240, %239 : vector<8x128xf32>
    %242 = arith.divf %240, %241 : vector<8x128xf32>
    %243 = vector.extract_strided_slice %232 {offsets = [0, 128], sizes = [8, 128], strides = [1, 1]} : vector<8x384xf32> to vector<8x128xf32>
    %244 = vector.extract_strided_slice %234 {offsets = [0, 128], sizes = [8, 128], strides = [1, 1]} : vector<8x384xf32> to vector<8x128xf32>
    %245 = arith.addf %243, %244 : vector<8x128xf32>
    %246 = arith.negf %245 : vector<8x128xf32>
    %247 = math.exp %246 : vector<8x128xf32>
    %cst_64 = arith.constant 1.000000e+00 : f32
    %248 = vector.broadcast %cst_64 : f32 to vector<8x128xf32>
    %249 = arith.addf %248, %247 : vector<8x128xf32>
    %250 = arith.divf %248, %249 : vector<8x128xf32>
    %251 = vector.extract_strided_slice %232 {offsets = [0, 256], sizes = [8, 128], strides = [1, 1]} : vector<8x384xf32> to vector<8x128xf32>
    %252 = vector.extract_strided_slice %234 {offsets = [0, 256], sizes = [8, 128], strides = [1, 1]} : vector<8x384xf32> to vector<8x128xf32>
    %253 = arith.mulf %242, %252 : vector<8x128xf32>
    %254 = arith.addf %251, %253 : vector<8x128xf32>
    %255 = math.tanh %254 : vector<8x128xf32>
    %cst_65 = arith.constant 1.000000e+00 : f32
    %256 = vector.broadcast %cst_65 : f32 to vector<8x128xf32>
    %257 = arith.subf %256, %250 : vector<8x128xf32>
    %258 = arith.mulf %257, %255 : vector<8x128xf32>
    %259 = arith.mulf %250, %224 : vector<8x128xf32>
    %260 = arith.addf %258, %259 : vector<8x128xf32>
    %261 = arith.index_cast %c6_i32 : i32 to index
    %c0_66 = arith.constant 0 : index
    %c0_67 = arith.constant 0 : index
    %262 = vector.load %arg10[%261, %c0_66, %c0_67] : memref<8x8x128xf32, #tpu.memory_space<vmem>>, vector<1x8x128xf32>
    %263 = vector.shape_cast %262 : vector<1x8x128xf32> to vector<8x128xf32>
    %264 = vector.shape_cast %260 : vector<8x128xf32> to vector<1x8x128xf32>
    tpu.vector_store %arg10[%261, %c0_66, %c0_67], %264 {strides = array<i32>} : memref<8x8x128xf32, #tpu.memory_space<vmem>>, vector<1x8x128xf32>,
    %c7_i32 = arith.constant 7 : i32
    %c8_i32_68 = arith.constant 8 : i32
    %265 = arith.muli %c7_i32, %c8_i32_68 : i32
    %266 = tpu.assume_multiple %265, 8 : i32
    %267 = arith.index_cast %266 : i32 to index
    %c0_69 = arith.constant 0 : index
    %268 = vector.load %arg12[%267, %c0_69] : memref<64x384xf32, #tpu.memory_space<vmem>>, vector<8x384xf32>
    %cst_70 = arith.constant dense<0.000000e+00> : vector<8x384xf32>
    %269 = tpu.matmul %260, %8, %cst_70 {dimension_numbers = #tpu.dot_dimension_numbers<[1], [0], [0], [1], [0, 0, 1, 1], [], []>} : vector<8x128xf32>, vector<128x384xf32>, vector<8x384xf32> -> vector<8x384xf32>
    %270 = arith.addf %269, %11 : vector<8x384xf32>
    %271 = vector.extract_strided_slice %268 {offsets = [0, 0], sizes = [8, 128], strides = [1, 1]} : vector<8x384xf32> to vector<8x128xf32>
    %272 = vector.extract_strided_slice %270 {offsets = [0, 0], sizes = [8, 128], strides = [1, 1]} : vector<8x384xf32> to vector<8x128xf32>
    %273 = arith.addf %271, %272 : vector<8x128xf32>
    %274 = arith.negf %273 : vector<8x128xf32>
    %275 = math.exp %274 : vector<8x128xf32>
    %cst_71 = arith.constant 1.000000e+00 : f32
    %276 = vector.broadcast %cst_71 : f32 to vector<8x128xf32>
    %277 = arith.addf %276, %275 : vector<8x128xf32>
    %278 = arith.divf %276, %277 : vector<8x128xf32>
    %279 = vector.extract_strided_slice %268 {offsets = [0, 128], sizes = [8, 128], strides = [1, 1]} : vector<8x384xf32> to vector<8x128xf32>
    %280 = vector.extract_strided_slice %270 {offsets = [0, 128], sizes = [8, 128], strides = [1, 1]} : vector<8x384xf32> to vector<8x128xf32>
    %281 = arith.addf %279, %280 : vector<8x128xf32>
    %282 = arith.negf %281 : vector<8x128xf32>
    %283 = math.exp %282 : vector<8x128xf32>
    %cst_72 = arith.constant 1.000000e+00 : f32
    %284 = vector.broadcast %cst_72 : f32 to vector<8x128xf32>
    %285 = arith.addf %284, %283 : vector<8x128xf32>
    %286 = arith.divf %284, %285 : vector<8x128xf32>
    %287 = vector.extract_strided_slice %268 {offsets = [0, 256], sizes = [8, 128], strides = [1, 1]} : vector<8x384xf32> to vector<8x128xf32>
    %288 = vector.extract_strided_slice %270 {offsets = [0, 256], sizes = [8, 128], strides = [1, 1]} : vector<8x384xf32> to vector<8x128xf32>
    %289 = arith.mulf %278, %288 : vector<8x128xf32>
    %290 = arith.addf %287, %289 : vector<8x128xf32>
    %291 = math.tanh %290 : vector<8x128xf32>
    %cst_73 = arith.constant 1.000000e+00 : f32
    %292 = vector.broadcast %cst_73 : f32 to vector<8x128xf32>
    %293 = arith.subf %292, %286 : vector<8x128xf32>
    %294 = arith.mulf %293, %291 : vector<8x128xf32>
    %295 = arith.mulf %286, %260 : vector<8x128xf32>
    %296 = arith.addf %294, %295 : vector<8x128xf32>
    %297 = arith.index_cast %c7_i32 : i32 to index
    %c0_74 = arith.constant 0 : index
    %c0_75 = arith.constant 0 : index
    %298 = vector.load %arg10[%297, %c0_74, %c0_75] : memref<8x8x128xf32, #tpu.memory_space<vmem>>, vector<1x8x128xf32>
    %299 = vector.shape_cast %298 : vector<1x8x128xf32> to vector<8x128xf32>
    %300 = vector.shape_cast %296 : vector<8x128xf32> to vector<1x8x128xf32>
    tpu.vector_store %arg10[%297, %c0_74, %c0_75], %300 {strides = array<i32>} : memref<8x8x128xf32, #tpu.memory_space<vmem>>, vector<1x8x128xf32>,
    %c8_i32_76 = arith.constant 8 : i32
    %c0_77 = arith.constant 0 : index
    %c0_78 = arith.constant 0 : index
    %301 = vector.load %arg7[%c0_77, %c0_78] : memref<128x128xf32, #tpu.memory_space<vmem>>, vector<128x128xf32>
    %cst_79 = arith.constant dense<0.000000e+00> : vector<8x128xf32>
    %302 = tpu.matmul %296, %301, %cst_79 {dimension_numbers = #tpu.dot_dimension_numbers<[1], [0], [0], [1], [0, 0, 1, 1], [], []>} : vector<8x128xf32>, vector<128x128xf32>, vector<8x128xf32> -> vector<8x128xf32>
    %c0_80 = arith.constant 0 : index
    %c0_81 = arith.constant 0 : index
    %303 = vector.load %arg2[%c0_80, %c0_81] : memref<8x7xf32, #tpu.memory_space<vmem>>, vector<8x7xf32>
    %c0_82 = arith.constant 0 : index
    %c0_83 = arith.constant 0 : index
    %304 = vector.load %arg8[%c0_82, %c0_83] : memref<7x128xf32, #tpu.memory_space<vmem>>, vector<7x128xf32>
    %cst_84 = arith.constant dense<0.000000e+00> : vector<8x128xf32>
    %305 = tpu.matmul %303, %304, %cst_84 {dimension_numbers = #tpu.dot_dimension_numbers<[1], [0], [0], [1], [0, 0, 1, 1], [], []>} : vector<8x7xf32>, vector<7x128xf32>, vector<8x128xf32> -> vector<8x128xf32>
    %306 = arith.addf %302, %305 : vector<8x128xf32>
    %c0_85 = arith.constant 0 : index
    %c0_86 = arith.constant 0 : index
    %307 = vector.load %arg9[%c0_85, %c0_86] : memref<1x128xf32, #tpu.memory_space<vmem>>, vector<1x128xf32>
    %308 = vector.broadcast %307 : vector<1x128xf32> to vector<8x128xf32>
    %309 = arith.addf %306, %308 : vector<8x128xf32>
    %c0_87 = arith.constant 0 : index
    %c0_88 = arith.constant 0 : index
    %310 = vector.load %arg11[%c0_87, %c0_88] : memref<8x128xf32, #tpu.memory_space<vmem>>, vector<8x128xf32>
    tpu.vector_store %arg11[%c0_87, %c0_88], %309 {strides = array<i32>} : memref<8x128xf32, #tpu.memory_space<vmem>>, vector<8x128xf32>,
    return
  }
  func.func @transform_0(%arg0: i32) -> (i32, i32, i32) {
    %c0_i32 = arith.constant 0 : i32
    %c0_i32_0 = arith.constant 0 : i32
    %c0_i32_1 = arith.constant 0 : i32
    return %c0_i32, %arg0, %c0_i32_0 : i32, i32, i32
  }
  func.func @transform_1(%arg0: i32) -> (i32, i32) {
    %c0_i32 = arith.constant 0 : i32
    %c0_i32_0 = arith.constant 0 : i32
    return %arg0, %c0_i32 : i32, i32
  }
  func.func @transform_2(%arg0: i32) -> (i32, i32) {
    %c0_i32 = arith.constant 0 : i32
    %c0_i32_0 = arith.constant 0 : i32
    %c0_i32_1 = arith.constant 0 : i32
    return %c0_i32, %c0_i32_0 : i32, i32
  }
  func.func @transform_3(%arg0: i32) -> (i32, i32) {
    %c0_i32 = arith.constant 0 : i32
    %c0_i32_0 = arith.constant 0 : i32
    %c0_i32_1 = arith.constant 0 : i32
    return %c0_i32, %c0_i32_0 : i32, i32
  }
  func.func @transform_4(%arg0: i32) -> (i32, i32) {
    %c0_i32 = arith.constant 0 : i32
    %c0_i32_0 = arith.constant 0 : i32
    %c0_i32_1 = arith.constant 0 : i32
    return %c0_i32, %c0_i32_0 : i32, i32
  }
  func.func @transform_5(%arg0: i32) -> (i32, i32) {
    %c0_i32 = arith.constant 0 : i32
    %c0_i32_0 = arith.constant 0 : i32
    %c0_i32_1 = arith.constant 0 : i32
    return %c0_i32, %c0_i32_0 : i32, i32
  }
  func.func @transform_6(%arg0: i32) -> (i32, i32) {
    %c0_i32 = arith.constant 0 : i32
    %c0_i32_0 = arith.constant 0 : i32
    %c0_i32_1 = arith.constant 0 : i32
    return %c0_i32, %c0_i32_0 : i32, i32
  }
  func.func @transform_7(%arg0: i32) -> (i32, i32) {
    %c0_i32 = arith.constant 0 : i32
    %c0_i32_0 = arith.constant 0 : i32
    %c0_i32_1 = arith.constant 0 : i32
    return %c0_i32, %c0_i32_0 : i32, i32
  }
  func.func @transform_8(%arg0: i32) -> (i32, i32) {
    %c0_i32 = arith.constant 0 : i32
    %c0_i32_0 = arith.constant 0 : i32
    %c0_i32_1 = arith.constant 0 : i32
    return %c0_i32, %c0_i32_0 : i32, i32
  }
  func.func @transform_9(%arg0: i32) -> (i32, i32, i32) {
    %c0_i32 = arith.constant 0 : i32
    %c0_i32_0 = arith.constant 0 : i32
    %c0_i32_1 = arith.constant 0 : i32
    return %c0_i32, %arg0, %c0_i32_0 : i32, i32, i32
  }
  func.func @transform_10(%arg0: i32) -> (i32, i32) {
    %c0_i32 = arith.constant 0 : i32
    %c0_i32_0 = arith.constant 0 : i32
    return %arg0, %c0_i32 : i32, i32
  }
}

</mosaic_0001>

<llo_original>
// kernel: rnn_concat_encoder_forward.1
$region0: #{rnn_concat_encoder_forward.1}
  #allocation0 [shape = 'u32[]', space=smem, size = 0x4, offset = 0x4, fixed_abs, tag = 'smem constant byte address 0x4 - core index']
  #allocation1 [shape = 'u32[144,128]{1,0:T(1,128)}', space=vmem, size = 0x12000, scoped, tag = 'internal scratch']
  #allocation2 [shape = 'f32[64,384]{1,0:T(8,128)}', space=vmem, size = 0x18000, scoped, tag = 'scratch operand']
  %s0 = inlined_call_operand.hbm [shape: f32[8,8,4], index: 0, kind: input, shape index: {}]
  %s1 = inlined_call_operand.hbm [shape: f32[8,7], index: 1, kind: input, shape index: {}]
  %s2 = inlined_call_operand.hbm [shape: f32[4,384], index: 2, kind: input, shape index: {}]
  %s3 = inlined_call_operand.hbm [shape: f32[128,384], index: 3, kind: input, shape index: {}]
  %s4 = inlined_call_operand.hbm [shape: f32[1,384], index: 4, kind: input, shape index: {}]
  %s5 = inlined_call_operand.hbm [shape: f32[1,384], index: 5, kind: input, shape index: {}]
  %s6 = inlined_call_operand.hbm [shape: f32[128,128], index: 6, kind: input, shape index: {}]
  %s7 = inlined_call_operand.hbm [shape: f32[7,128], index: 7, kind: input, shape index: {}]
  %s8 = inlined_call_operand.hbm [shape: f32[1,128], index: 8, kind: input, shape index: {}]
  %s9 = inlined_call_operand.hbm [shape: f32[8,8,128], index: 9, kind: output, shape index: {0}]
  %s10 = inlined_call_operand.hbm [shape: f32[8,128], index: 10, kind: output, shape index: {1}]
  %11 = xla_tuple %s9, %s10
  %s12 = sld [smem:[#allocation0]]
  $region90: #{rnn_concat_encoder_forward.1} parent=0
    _
  %s14 = ssub.s32 1, %s12
  %s15 = scalar_select 0, %s14, %s12
  $region1: #{rnn_concat_encoder_forward.1} parent=0
    #allocation3 [shape = 'u8[32768]{0}', space=vmem, size = 0x8000, scoped, tag = 'input window, operand 0, single buffered']
    #allocation4 [shape = 's32[1]{0}', space=sflag, size = 0x4, scoped, tag = 'scoped memory for rnn_concat_encoder_forward.1']
    #allocation5 [shape = 's32[1]{0}', space=sflag, size = 0x4, scoped, tag = 'scoped memory for rnn_concat_encoder_forward.1']
    #allocation6 [shape = 'u8[4096]{0}', space=vmem, size = 0x1000, scoped, tag = 'input window, operand 1, single buffered']
    #allocation7 [shape = 's32[1]{0}', space=sflag, size = 0x4, scoped, tag = 'scoped memory for rnn_concat_encoder_forward.1']
    #allocation8 [shape = 'u8[6144]{0}', space=vmem, size = 0x1800, scoped, tag = 'input window, operand 2, single buffered']
    #allocation9 [shape = 'u8[196608]{0}', space=vmem, size = 0x30000, scoped, tag = 'input window, operand 3, single buffered']
    #allocation10 [shape = 's32[1]{0}', space=sflag, size = 0x4, scoped, tag = 'scoped memory for rnn_concat_encoder_forward.1']
    #allocation11 [shape = 'u8[1536]{0}', space=vmem, size = 0x800, scoped, tag = 'input window, operand 4, single buffered']
    #allocation12 [shape = 'u8[1536]{0}', space=vmem, size = 0x800, scoped, tag = 'input window, operand 5, single buffered']
    #allocation13 [shape = 's32[1]{0}', space=sflag, size = 0x4, scoped, tag = 'scoped memory for rnn_concat_encoder_forward.1']
    #allocation14 [shape = 'u8[65536]{0}', space=vmem, size = 0x10000, scoped, tag = 'input window, operand 6, single buffered']
    #allocation15 [shape = 'u8[4096]{0}', space=vmem, size = 0x1000, scoped, tag = 'input window, operand 7, single buffered']
    #allocation16 [shape = 's32[1]{0}', space=sflag, size = 0x4, scoped, tag = 'scoped memory for rnn_concat_encoder_forward.1']
    #allocation17 [shape = 'u8[512]{0}', space=vmem, size = 0x400, scoped, tag = 'input window, operand 8, single buffered']
    #allocation18 [shape = 'u8[32768]{0}', space=vmem, size = 0x8000, scoped, tag = 'output window, operand 0, single buffered']
    #allocation19 [shape = 'u8[4096]{0}', space=vmem, size = 0x1000, scoped, tag = 'output window, operand 1, single buffered']
    #allocation20 [shape = 's32[1]{0}', space=sflag, size = 0x4, scoped, tag = 'scoped memory for rnn_concat_encoder_forward.1']
    %16 = vsyncpa [#allocation4], 0
    %17 = vsyncpa [#allocation7], 0
    %18 = vsyncpa [#allocation10], 0
    %19 = vsyncpa [#allocation13], 0
    %20 = vsyncpa [#allocation16], 0
    %21 = vsyncpa [#allocation5], 0
    %22 = vsyncpa [#allocation20], 0
    // Predicated region
    $region2: #{rnn_concat_encoder_forward.1} parent=1 // pred_check
      _
    $region3: #{rnn_concat_encoder_forward.1} parent=1 // pred_check_branch
      %24 = sbr.rel (0) target = $region5
    $region4: #{rnn_concat_encoder_forward.1} parent=1 // pred_region
      %s26 = ssub.s32 1024, 1024
      %27 = vsyncadd [#allocation4], %s26
      %s28 = sshll.u32 [#allocation3], 4
      %s29 = int_to_ptr.vmem [resolvable:$true] %s28
      %34 = dma.hbm_to_vmem [thread:$0]  %s0, 1024, %s29, [#allocation4], 128, 128, 8
    $region5: #{rnn_concat_encoder_forward.1} parent=1 // pred_fallthru
      _
    // Predicated region
    $region6: #{rnn_concat_encoder_forward.1} parent=1 // pred_check
      _
    $region7: #{rnn_concat_encoder_forward.1} parent=1 // pred_check_branch
      %36 = sbr.rel (0) target = $region9
    $region8: #{rnn_concat_encoder_forward.1} parent=1 // pred_region
      %s38 = ssub.s32 128, 128
      %39 = vsyncadd [#allocation7], %s38
      %s41 = sshll.u32 [#allocation6], 4
      %s42 = int_to_ptr.vmem [resolvable:$true] %s41
      %44 = dma.hbm_to_vmem [thread:$0]  %s1, 128, %s42, [#allocation7]
    $region9: #{rnn_concat_encoder_forward.1} parent=1 // pred_fallthru
      _
    // Predicated region
    $region10: #{rnn_concat_encoder_forward.1} parent=1 // pred_check
      _
    $region11: #{rnn_concat_encoder_forward.1} parent=1 // pred_check_branch
      %46 = sbr.rel (0) target = $region13
    $region12: #{rnn_concat_encoder_forward.1} parent=1 // pred_region
      %s48 = ssub.s32 192, 192
      %49 = vsyncadd [#allocation7], %s48
      %s51 = sshll.u32 [#allocation8], 4
      %s52 = int_to_ptr.vmem [resolvable:$true] %s51
      %54 = dma.hbm_to_vmem [thread:$0]  %s2, 192, %s52, [#allocation7]
    $region13: #{rnn_concat_encoder_forward.1} parent=1 // pred_fallthru
      _
    // Predicated region
    $region14: #{rnn_concat_encoder_forward.1} parent=1 // pred_check
      _
    $region15: #{rnn_concat_encoder_forward.1} parent=1 // pred_check_branch
      %56 = sbr.rel (0) target = $region17
    $region16: #{rnn_concat_encoder_forward.1} parent=1 // pred_region
      %s58 = ssub.s32 6144, 6144
      %59 = vsyncadd [#allocation10], %s58
      %s60 = sshll.u32 [#allocation9], 4
      %s61 = int_to_ptr.vmem [resolvable:$true] %s60
      %66 = dma.hbm_to_vmem [thread:$0]  %s3, 6144, %s61, [#allocation10], 384, 384, 24
    $region17: #{rnn_concat_encoder_forward.1} parent=1 // pred_fallthru
      _
    // Predicated region
    $region18: #{rnn_concat_encoder_forward.1} parent=1 // pred_check
      _
    $region19: #{rnn_concat_encoder_forward.1} parent=1 // pred_check_branch
      %68 = sbr.rel (0) target = $region21
    $region20: #{rnn_concat_encoder_forward.1} parent=1 // pred_region
      %s70 = ssub.s32 48, 48
      %71 = vsyncadd [#allocation10], %s70
      %s73 = sshll.u32 [#allocation11], 4
      %s74 = int_to_ptr.vmem [resolvable:$true] %s73
      %76 = dma.hbm_to_vmem [thread:$0]  %s4, 48, %s74, [#allocation10]
    $region21: #{rnn_concat_encoder_forward.1} parent=1 // pred_fallthru
      _
    // Predicated region
    $region22: #{rnn_concat_encoder_forward.1} parent=1 // pred_check
      _
    $region23: #{rnn_concat_encoder_forward.1} parent=1 // pred_check_branch
      %78 = sbr.rel (0) target = $region25
    $region24: #{rnn_concat_encoder_forward.1} parent=1 // pred_region
      %s80 = ssub.s32 48, 48
      %81 = vsyncadd [#allocation13], %s80
      %s83 = sshll.u32 [#allocation12], 4
      %s84 = int_to_ptr.vmem [resolvable:$true] %s83
      %86 = dma.hbm_to_vmem [thread:$0]  %s5, 48, %s84, [#allocation13]
    $region25: #{rnn_concat_encoder_forward.1} parent=1 // pred_fallthru
      _
    // Predicated region
    $region26: #{rnn_concat_encoder_forward.1} parent=1 // pred_check
      _
    $region27: #{rnn_concat_encoder_forward.1} parent=1 // pred_check_branch
      %88 = sbr.rel (0) target = $region29
    $region28: #{rnn_concat_encoder_forward.1} parent=1 // pred_region
      %s90 = ssub.s32 2048, 2048
      %91 = vsyncadd [#allocation13], %s90
      %s92 = sshll.u32 [#allocation14], 4
      %s93 = int_to_ptr.vmem [resolvable:$true] %s92
      %98 = dma.hbm_to_vmem [thread:$0]  %s6, 2048, %s93, [#allocation13], 128, 128, 8
    $region29: #{rnn_concat_encoder_forward.1} parent=1 // pred_fallthru
      _
    // Predicated region
    $region30: #{rnn_concat_encoder_forward.1} parent=1 // pred_check
      _
    $region31: #{rnn_concat_encoder_forward.1} parent=1 // pred_check_branch
      %100 = sbr.rel (0) target = $region33
    $region32: #{rnn_concat_encoder_forward.1} parent=1 // pred_region
      %s102 = ssub.s32 128, 128
      %103 = vsyncadd [#allocation16], %s102
      %s105 = sshll.u32 [#allocation15], 4
      %s106 = int_to_ptr.vmem [resolvable:$true] %s105
      %108 = dma.hbm_to_vmem [thread:$0]  %s7, 128, %s106, [#allocation16]
    $region33: #{rnn_concat_encoder_forward.1} parent=1 // pred_fallthru
      _
    // Predicated region
    $region34: #{rnn_concat_encoder_forward.1} parent=1 // pred_check
      _
    $region35: #{rnn_concat_encoder_forward.1} parent=1 // pred_check_branch
      %110 = sbr.rel (0) target = $region37
    $region36: #{rnn_concat_encoder_forward.1} parent=1 // pred_region
      %s112 = ssub.s32 16, 16
      %113 = vsyncadd [#allocation16], %s112
      %s115 = sshll.u32 [#allocation17], 4
      %s116 = int_to_ptr.vmem [resolvable:$true] %s115
      %118 = dma.hbm_to_vmem [thread:$0]  %s8, 16, %s116, [#allocation16]
    $region37: #{rnn_concat_encoder_forward.1} parent=1 // pred_fallthru
      _
    // Predicated region
    $region38: #{rnn_concat_encoder_forward.1} parent=1 // pred_check
      _
    $region39: #{rnn_concat_encoder_forward.1} parent=1 // pred_check_branch
      %120 = sbr.rel (0) target = $region41
    $region40: #{rnn_concat_encoder_forward.1} parent=1 // pred_region
      %121 = dma.done [#allocation4], 1024
    $region41: #{rnn_concat_encoder_forward.1} parent=1 // pred_fallthru
      _
    // Predicated region
    $region42: #{rnn_concat_encoder_forward.1} parent=1 // pred_check
      _
    $region43: #{rnn_concat_encoder_forward.1} parent=1 // pred_check_branch
      %123 = sbr.rel (0) target = $region45
    $region44: #{rnn_concat_encoder_forward.1} parent=1 // pred_region
      %124 = dma.done [#allocation7], 128
    $region45: #{rnn_concat_encoder_forward.1} parent=1 // pred_fallthru
      _
    // Predicated region
    $region46: #{rnn_concat_encoder_forward.1} parent=1 // pred_check
      _
    $region47: #{rnn_concat_encoder_forward.1} parent=1 // pred_check_branch
      %126 = sbr.rel (0) target = $region49
    $region48: #{rnn_concat_encoder_forward.1} parent=1 // pred_region
      %127 = dma.done [#allocation7], 192
    $region49: #{rnn_concat_encoder_forward.1} parent=1 // pred_fallthru
      _
    // Predicated region
    $region50: #{rnn_concat_encoder_forward.1} parent=1 // pred_check
      _
    $region51: #{rnn_concat_encoder_forward.1} parent=1 // pred_check_branch
      %129 = sbr.rel (0) target = $region53
    $region52: #{rnn_concat_encoder_forward.1} parent=1 // pred_region
      %130 = dma.done [#allocation10], 6144
    $region53: #{rnn_concat_encoder_forward.1} parent=1 // pred_fallthru
      _
    // Predicated region
    $region54: #{rnn_concat_encoder_forward.1} parent=1 // pred_check
      _
    $region55: #{rnn_concat_encoder_forward.1} parent=1 // pred_check_branch
      %132 = sbr.rel (0) target = $region57
    $region56: #{rnn_concat_encoder_forward.1} parent=1 // pred_region
      %133 = dma.done [#allocation10], 48
    $region57: #{rnn_concat_encoder_forward.1} parent=1 // pred_fallthru
      _
    // Predicated region
    $region58: #{rnn_concat_encoder_forward.1} parent=1 // pred_check
      _
    $region59: #{rnn_concat_encoder_forward.1} parent=1 // pred_check_branch
      %135 = sbr.rel (0) target = $region61
    $region60: #{rnn_concat_encoder_forward.1} parent=1 // pred_region
      %136 = dma.done [#allocation13], 48
    $region61: #{rnn_concat_encoder_forward.1} parent=1 // pred_fallthru
      _
    // Predicated region
    $region62: #{rnn_concat_encoder_forward.1} parent=1 // pred_check
      _
    $region63: #{rnn_concat_encoder_forward.1} parent=1 // pred_check_branch
      %138 = sbr.rel (0) target = $region65
    $region64: #{rnn_concat_encoder_forward.1} parent=1 // pred_region
      %139 = dma.done [#allocation13], 2048
    $region65: #{rnn_concat_encoder_forward.1} parent=1 // pred_fallthru
      _
    // Predicated region
    $region66: #{rnn_concat_encoder_forward.1} parent=1 // pred_check
      _
    $region67: #{rnn_concat_encoder_forward.1} parent=1 // pred_check_branch
      %141 = sbr.rel (0) target = $region69
    $region68: #{rnn_concat_encoder_forward.1} parent=1 // pred_region
      %142 = dma.done [#allocation16], 128
    $region69: #{rnn_concat_encoder_forward.1} parent=1 // pred_fallthru
      _
    // Predicated region
    $region70: #{rnn_concat_encoder_forward.1} parent=1 // pred_check
      _
    $region71: #{rnn_concat_encoder_forward.1} parent=1 // pred_check_branch
      %144 = sbr.rel (0) target = $region73
    $region72: #{rnn_concat_encoder_forward.1} parent=1 // pred_region
      %145 = dma.done [#allocation16], 16
    $region73: #{rnn_concat_encoder_forward.1} parent=1 // pred_fallthru
      _
    %v146 = vld [vmem:[#allocation3] sm:$0xff]
    %v147 = vld [vmem:[#allocation3 + $0x8] sm:$0xff]
    %v148 = vld [vmem:[#allocation3 + $0x10] sm:$0xff]
    %v149 = vld [vmem:[#allocation3 + $0x18] sm:$0xff]
    %v150 = vld [vmem:[#allocation3 + $0x20] sm:$0xff]
    %v151 = vld [vmem:[#allocation3 + $0x28] sm:$0xff]
    %v152 = vld [vmem:[#allocation3 + $0x30] sm:$0xff]
    %v153 = vld [vmem:[#allocation3 + $0x38] sm:$0xff]
    %v154 = vld [vmem:[#allocation8] sm:$0xff]
    %v155 = vld [vmem:[#allocation8 + $0x8] sm:$0xf]
    %v156 = vld [vmem:[#allocation11] sm:$0x7]
    %v158 = vlaneseq
    %v159 = vshrl.u32 %v158, 7
    %v160 = vsub.s32 0, %v159
    %v161 = vrot.slane %v156, %v160
    %v162 = vlaneseq
    %v163 = vshrl.u32 %v162, 7
    %v164 = vsub.s32 1, %v163
    %v165 = vrot.slane %v156, %v164
    %v166 = vlaneseq
    %v167 = vshrl.u32 %v166, 7
    %v168 = vsub.s32 2, %v167
    %v169 = vrot.slane %v156, %v168
    %v175 = vcombine.high %v154, %v154
    %vm176 = vcmask 31744
    %v178 = vsel %vm176, %v146, 0
    %v181 = vsel %vm176, %v147, 0
    %v184 = vsel %vm176, %v148, 0
    %v187 = vsel %vm176, %v149, 0
    %v190 = vsel %vm176, %v150, 0
    %v193 = vsel %vm176, %v151, 0
    %v196 = vsel %vm176, %v152, 0
    %v199 = vsel %vm176, %v153, 0
    %vm201 = vcmask 1043456
    %v202 = vsel %vm201, %v154, 0
    %v204 = vsel %vm201, %v175, 0
    %v206 = vsel %vm201, %v155, 0
    %208 = vmatprep.subr.mxu0 %v204
    %209 = vmatpush1.msra.mxu0 %v202
    %210 = vmatprep.subr.mxu0 0.0
    %211 = vmatpush1.msra.mxu0 0.0
    %212 = vmatprep.subr.mxu0 0.0
    %213 = vmatpush1.msra.mxu0 0.0
    %214 = vmatprep.subr.mxu0 0.0
    %215 = vmatpush1.msra.mxu0 0.0
    %216 = vmatprep.subr.mxu0 0.0
    %217 = vmatpush1.msra.mxu0 0.0
    %218 = vmatprep.subr.mxu0 0.0
    %219 = vmatpush1.msra.mxu0 0.0
    %220 = vmatprep.subr.mxu0 0.0
    %221 = vmatpush1.msra.mxu0 0.0
    %222 = vmatprep.subr.mxu0 0.0
    %223 = vmatpush1.msra.mxu0 0.0
    %224 = vmatprep.subr.mxu0 0.0
    %225 = vmatpush1.msra.mxu0 0.0
    %226 = vmatprep.subr.mxu0 0.0
    %227 = vmatpush1.msra.mxu0 0.0
    %228 = vmatprep.subr.mxu0 0.0
    %229 = vmatpush1.msra.mxu0 0.0
    %230 = vmatprep.subr.mxu0 0.0
    %231 = vmatpush1.msra.mxu0 0.0
    %232 = vmatprep.subr.mxu0 0.0
    %233 = vmatpush1.msra.mxu0 0.0
    %234 = vmatprep.subr.mxu0 0.0
    %235 = vmatpush1.msra.mxu0 0.0
    %236 = vmatprep.subr.mxu0 0.0
    %237 = vmatpush1.msra.mxu0 0.0
    %238 = vmatprep.subr.mxu0 0.0
    %239 = vmatpush1.msra.mxu0 0.0
    %240 = vmatprep.subr.mxu0 0.0
    %241 = vmatpush1.msra.mxu0 0.0
    %242 = vmatprep.subr.mxu0 0.0
    %243 = vmatpush1.msra.mxu0 0.0
    %244 = vmatprep.subr.mxu0 0.0
    %245 = vmatpush1.msra.mxu0 0.0
    %246 = vmatprep.subr.mxu0 0.0
    %247 = vmatpush1.msra.mxu0 0.0
    %248 = vmatprep.subr.mxu0 0.0
    %249 = vmatpush1.msra.mxu0 0.0
    %250 = vmatprep.subr.mxu0 0.0
    %251 = vmatpush1.msra.mxu0 0.0
    %252 = vmatprep.subr.mxu0 0.0
    %253 = vmatpush1.msra.mxu0 0.0
    %254 = vmatprep.subr.mxu0 0.0
    %255 = vmatpush1.msra.mxu0 0.0
    %256 = vmatprep.subr.mxu0 0.0
    %257 = vmatpush1.msra.mxu0 0.0
    %258 = vmatprep.subr.mxu0 0.0
    %259 = vmatpush1.msra.mxu0 0.0
    %260 = vmatprep.subr.mxu0 0.0
    %261 = vmatpush1.msra.mxu0 0.0
    %262 = vmatprep.subr.mxu0 0.0
    %263 = vmatpush1.msra.mxu0 0.0
    %264 = vmatprep.subr.mxu0 0.0
    %265 = vmatpush1.msra.mxu0 0.0
    %266 = vmatprep.subr.mxu0 0.0
    %267 = vmatpush1.msra.mxu0 0.0
    %268 = vmatprep.subr.mxu0 0.0
    %269 = vmatpush1.msra.mxu0 0.0
    %270 = vmatprep.subr.mxu0 0.0
    %271 = vmatpush1.msra.mxu0 0.0
    %272 = vmatprep.mubr.f32.mxu0 0.0
    %273 = vmatmul.mubr.f32.gmra.mrb[0].mxu0 %v178
    %v274 = vpop.f32.mrb[0].mxu0
    %v275 = vadd.f32 %v161, %v274
    %v276 = vpop.f32.mrb[0].mxu0
    %v277 = vadd.f32 %v165, %v276
    %278 = vmatprep.mubr.f32.mxu0 0.0
    %279 = vmatmul.mubr.f32.gmra.mrb[0].mxu0 %v181
    %v280 = vpop.f32.mrb[0].mxu0
    %v281 = vadd.f32 %v161, %v280
    %v282 = vpop.f32.mrb[0].mxu0
    %v283 = vadd.f32 %v165, %v282
    %284 = vmatprep.mubr.f32.mxu0 0.0
    %285 = vmatmul.mubr.f32.gmra.mrb[0].mxu0 %v184
    %v286 = vpop.f32.mrb[0].mxu0
    %v287 = vadd.f32 %v161, %v286
    %v288 = vpop.f32.mrb[0].mxu0
    %v289 = vadd.f32 %v165, %v288
    %290 = vmatprep.mubr.f32.mxu0 0.0
    %291 = vmatmul.mubr.f32.gmra.mrb[0].mxu0 %v187
    %v292 = vpop.f32.mrb[0].mxu0
    %v293 = vadd.f32 %v161, %v292
    %v294 = vpop.f32.mrb[0].mxu0
    %v295 = vadd.f32 %v165, %v294
    %296 = vmatprep.mubr.f32.mxu0 0.0
    %297 = vmatmul.mubr.f32.gmra.mrb[0].mxu0 %v190
    %v298 = vpop.f32.mrb[0].mxu0
    %v299 = vadd.f32 %v161, %v298
    %v300 = vpop.f32.mrb[0].mxu0
    %v301 = vadd.f32 %v165, %v300
    %302 = vmatprep.mubr.f32.mxu0 0.0
    %303 = vmatmul.mubr.f32.gmra.mrb[0].mxu0 %v193
    %v304 = vpop.f32.mrb[0].mxu0
    %v305 = vadd.f32 %v161, %v304
    %v306 = vpop.f32.mrb[0].mxu0
    %v307 = vadd.f32 %v165, %v306
    %308 = vmatprep.mubr.f32.mxu0 0.0
    %309 = vmatmul.mubr.f32.gmra.mrb[0].mxu0 %v196
    %v310 = vpop.f32.mrb[0].mxu0
    %v311 = vadd.f32 %v161, %v310
    %v312 = vpop.f32.mrb[0].mxu0
    %v313 = vadd.f32 %v165, %v312
    %314 = vmatprep.mubr.f32.mxu0 0.0
    %315 = vmatmul.mubr.f32.gmra.mrb[0].mxu0 %v199
    %v316 = vpop.f32.mrb[0].mxu0
    %v317 = vadd.f32 %v161, %v316
    %v318 = vpop.f32.mrb[0].mxu0
    %v319 = vadd.f32 %v165, %v318
    %320 = vdwg.mxu0
    %321 = vmatprep.subr.mxu0 0.0
    %322 = vmatpush1.msra.mxu0 %v206
    %323 = vmatprep.subr.mxu0 0.0
    %324 = vmatpush1.msra.mxu0 0.0
    %325 = vmatprep.subr.mxu0 0.0
    %326 = vmatpush1.msra.mxu0 0.0
    %327 = vmatprep.subr.mxu0 0.0
    %328 = vmatpush1.msra.mxu0 0.0
    %329 = vmatprep.subr.mxu0 0.0
    %330 = vmatpush1.msra.mxu0 0.0
    %331 = vmatprep.subr.mxu0 0.0
    %332 = vmatpush1.msra.mxu0 0.0
    %333 = vmatprep.subr.mxu0 0.0
    %334 = vmatpush1.msra.mxu0 0.0
    %335 = vmatprep.subr.mxu0 0.0
    %336 = vmatpush1.msra.mxu0 0.0
    %337 = vmatprep.subr.mxu0 0.0
    %338 = vmatpush1.msra.mxu0 0.0
    %339 = vmatprep.subr.mxu0 0.0
    %340 = vmatpush1.msra.mxu0 0.0
    %341 = vmatprep.subr.mxu0 0.0
    %342 = vmatpush1.msra.mxu0 0.0
    %343 = vmatprep.subr.mxu0 0.0
    %344 = vmatpush1.msra.mxu0 0.0
    %345 = vmatprep.subr.mxu0 0.0
    %346 = vmatpush1.msra.mxu0 0.0
    %347 = vmatprep.subr.mxu0 0.0
    %348 = vmatpush1.msra.mxu0 0.0
    %349 = vmatprep.subr.mxu0 0.0
    %350 = vmatpush1.msra.mxu0 0.0
    %351 = vmatprep.subr.mxu0 0.0
    %352 = vmatpush1.msra.mxu0 0.0
    %353 = vmatprep.subr.mxu0 0.0
    %354 = vmatpush1.msra.mxu0 0.0
    %355 = vmatprep.subr.mxu0 0.0
    %356 = vmatpush1.msra.mxu0 0.0
    %357 = vmatprep.subr.mxu0 0.0
    %358 = vmatpush1.msra.mxu0 0.0
    %359 = vmatprep.subr.mxu0 0.0
    %360 = vmatpush1.msra.mxu0 0.0
    %361 = vmatprep.subr.mxu0 0.0
    %362 = vmatpush1.msra.mxu0 0.0
    %363 = vmatprep.subr.mxu0 0.0
    %364 = vmatpush1.msra.mxu0 0.0
    %365 = vmatprep.subr.mxu0 0.0
    %366 = vmatpush1.msra.mxu0 0.0
    %367 = vmatprep.subr.mxu0 0.0
    %368 = vmatpush1.msra.mxu0 0.0
    %369 = vmatprep.subr.mxu0 0.0
    %370 = vmatpush1.msra.mxu0 0.0
    %371 = vmatprep.subr.mxu0 0.0
    %372 = vmatpush1.msra.mxu0 0.0
    %373 = vmatprep.subr.mxu0 0.0
    %374 = vmatpush1.msra.mxu0 0.0
    %375 = vmatprep.subr.mxu0 0.0
    %376 = vmatpush1.msra.mxu0 0.0
    %377 = vmatprep.subr.mxu0 0.0
    %378 = vmatpush1.msra.mxu0 0.0
    %379 = vmatprep.subr.mxu0 0.0
    %380 = vmatpush1.msra.mxu0 0.0
    %381 = vmatprep.subr.mxu0 0.0
    %382 = vmatpush1.msra.mxu0 0.0
    %383 = vmatprep.subr.mxu0 0.0
    %384 = vmatpush1.msra.mxu0 0.0
    %385 = vmatprep.mubr.f32.mxu0 0.0
    %386 = vmatmul.mubr.f32.gmra.mrb[0].mxu0 %v178
    %v387 = vpop.f32.mrb[0].mxu0
    %v388 = vadd.f32 %v169, %v387
    %v389 = vpop.f32.mrb[0].mxu0
    %390 = vmatprep.mubr.f32.mxu0 0.0
    %391 = vmatmul.mubr.f32.gmra.mrb[0].mxu0 %v181
    %v392 = vpop.f32.mrb[0].mxu0
    %v393 = vadd.f32 %v169, %v392
    %v394 = vpop.f32.mrb[0].mxu0
    %395 = vmatprep.mubr.f32.mxu0 0.0
    %396 = vmatmul.mubr.f32.gmra.mrb[0].mxu0 %v184
    %v397 = vpop.f32.mrb[0].mxu0
    %v398 = vadd.f32 %v169, %v397
    %v399 = vpop.f32.mrb[0].mxu0
    %400 = vmatprep.mubr.f32.mxu0 0.0
    %401 = vmatmul.mubr.f32.gmra.mrb[0].mxu0 %v187
    %v402 = vpop.f32.mrb[0].mxu0
    %v403 = vadd.f32 %v169, %v402
    %v404 = vpop.f32.mrb[0].mxu0
    %405 = vmatprep.mubr.f32.mxu0 0.0
    %406 = vmatmul.mubr.f32.gmra.mrb[0].mxu0 %v190
    %v407 = vpop.f32.mrb[0].mxu0
    %v408 = vadd.f32 %v169, %v407
    %v409 = vpop.f32.mrb[0].mxu0
    %410 = vmatprep.mubr.f32.mxu0 0.0
    %411 = vmatmul.mubr.f32.gmra.mrb[0].mxu0 %v193
    %v412 = vpop.f32.mrb[0].mxu0
    %v413 = vadd.f32 %v169, %v412
    %v414 = vpop.f32.mrb[0].mxu0
    %415 = vmatprep.mubr.f32.mxu0 0.0
    %416 = vmatmul.mubr.f32.gmra.mrb[0].mxu0 %v196
    %v417 = vpop.f32.mrb[0].mxu0
    %v418 = vadd.f32 %v169, %v417
    %v419 = vpop.f32.mrb[0].mxu0
    %420 = vmatprep.mubr.f32.mxu0 0.0
    %421 = vmatmul.mubr.f32.gmra.mrb[0].mxu0 %v199
    %v422 = vpop.f32.mrb[0].mxu0
    %v423 = vadd.f32 %v169, %v422
    %v424 = vpop.f32.mrb[0].mxu0
    %425 = vdwg.mxu0
    %426 = vst [vmem:[#allocation2] sm:$0xff] %v275
    %427 = vst [vmem:[#allocation2 + $0x8] sm:$0xff] %v277
    %428 = vst [vmem:[#allocation2 + $0x10] sm:$0xff] %v388
    %429 = vst [vmem:[#allocation2 + $0x18] sm:$0xff] %v281
    %430 = vst [vmem:[#allocation2 + $0x20] sm:$0xff] %v283
    %431 = vst [vmem:[#allocation2 + $0x28] sm:$0xff] %v393
    %432 = vst [vmem:[#allocation2 + $0x30] sm:$0xff] %v287
    %433 = vst [vmem:[#allocation2 + $0x38] sm:$0xff] %v289
    %434 = vst [vmem:[#allocation2 + $0x40] sm:$0xff] %v398
    %435 = vst [vmem:[#allocation2 + $0x48] sm:$0xff] %v293
    %436 = vst [vmem:[#allocation2 + $0x50] sm:$0xff] %v295
    %437 = vst [vmem:[#allocation2 + $0x58] sm:$0xff] %v403
    %438 = vst [vmem:[#allocation2 + $0x60] sm:$0xff] %v299
    %439 = vst [vmem:[#allocation2 + $0x68] sm:$0xff] %v301
    %440 = vst [vmem:[#allocation2 + $0x70] sm:$0xff] %v408
    %441 = vst [vmem:[#allocation2 + $0x78] sm:$0xff] %v305
    %442 = vst [vmem:[#allocation2 + $0x80] sm:$0xff] %v307
    %443 = vst [vmem:[#allocation2 + $0x88] sm:$0xff] %v413
    %444 = vst [vmem:[#allocation2 + $0x90] sm:$0xff] %v311
    %445 = vst [vmem:[#allocation2 + $0x98] sm:$0xff] %v313
    %446 = vst [vmem:[#allocation2 + $0xa0] sm:$0xff] %v418
    %447 = vst [vmem:[#allocation2 + $0xa8] sm:$0xff] %v317
    %448 = vst [vmem:[#allocation2 + $0xb0] sm:$0xff] %v319
    %449 = vst [vmem:[#allocation2 + $0xb8] sm:$0xff] %v423
    %v450 = vld [vmem:[#allocation9] sm:$0xff]
    %v451 = vld [vmem:[#allocation9 + $0x8] sm:$0xff]
    %v452 = vld [vmem:[#allocation9 + $0x10] sm:$0xff]
    %v453 = vld [vmem:[#allocation9 + $0x18] sm:$0xff]
    %v454 = vld [vmem:[#allocation9 + $0x20] sm:$0xff]
    %v455 = vld [vmem:[#allocation9 + $0x28] sm:$0xff]
    %v456 = vld [vmem:[#allocation9 + $0x30] sm:$0xff]
    %v457 = vld [vmem:[#allocation9 + $0x38] sm:$0xff]
    %v458 = vld [vmem:[#allocation9 + $0x40] sm:$0xff]
    %v459 = vld [vmem:[#allocation9 + $0x48] sm:$0xff]
    %v460 = vld [vmem:[#allocation9 + $0x50] sm:$0xff]
    %v461 = vld [vmem:[#allocation9 + $0x58] sm:$0xff]
    %v462 = vld [vmem:[#allocation9 + $0x60] sm:$0xff]
    %v463 = vld [vmem:[#allocation9 + $0x68] sm:$0xff]
    %v464 = vld [vmem:[#allocation9 + $0x70] sm:$0xff]
    %v465 = vld [vmem:[#allocation9 + $0x78] sm:$0xff]
    %v466 = vld [vmem:[#allocation9 + $0x80] sm:$0xff]
    %v467 = vld [vmem:[#allocation9 + $0x88] sm:$0xff]
    %v468 = vld [vmem:[#allocation9 + $0x90] sm:$0xff]
    %v469 = vld [vmem:[#allocation9 + $0x98] sm:$0xff]
    %v470 = vld [vmem:[#allocation9 + $0xa0] sm:$0xff]
    %v471 = vld [vmem:[#allocation9 + $0xa8] sm:$0xff]
    %v472 = vld [vmem:[#allocation9 + $0xb0] sm:$0xff]
    %v473 = vld [vmem:[#allocation9 + $0xb8] sm:$0xff]
    %v474 = vld [vmem:[#allocation9 + $0xc0] sm:$0xff]
    %v475 = vld [vmem:[#allocation9 + $0xc8] sm:$0xff]
    %v476 = vld [vmem:[#allocation9 + $0xd0] sm:$0xff]
    %v477 = vld [vmem:[#allocation9 + $0xd8] sm:$0xff]
    %v478 = vld [vmem:[#allocation9 + $0xe0] sm:$0xff]
    %v479 = vld [vmem:[#allocation9 + $0xe8] sm:$0xff]
    %v480 = vld [vmem:[#allocation9 + $0xf0] sm:$0xff]
    %v481 = vld [vmem:[#allocation9 + $0xf8] sm:$0xff]
    %v482 = vld [vmem:[#allocation9 + $0x100] sm:$0xff]
    %v483 = vld [vmem:[#allocation9 + $0x108] sm:$0xff]
    %v484 = vld [vmem:[#allocation9 + $0x110] sm:$0xff]
    %v485 = vld [vmem:[#allocation9 + $0x118] sm:$0xff]
    %v486 = vld [vmem:[#allocation9 + $0x120] sm:$0xff]
    %v487 = vld [vmem:[#allocation9 + $0x128] sm:$0xff]
    %v488 = vld [vmem:[#allocation9 + $0x130] sm:$0xff]
    %v489 = vld [vmem:[#allocation9 + $0x138] sm:$0xff]
    %v490 = vld [vmem:[#allocation9 + $0x140] sm:$0xff]
    %v491 = vld [vmem:[#allocation9 + $0x148] sm:$0xff]
    %v492 = vld [vmem:[#allocation9 + $0x150] sm:$0xff]
    %v493 = vld [vmem:[#allocation9 + $0x158] sm:$0xff]
    %v494 = vld [vmem:[#allocation9 + $0x160] sm:$0xff]
    %v495 = vld [vmem:[#allocation9 + $0x168] sm:$0xff]
    %v496 = vld [vmem:[#allocation9 + $0x170] sm:$0xff]
    %v497 = vld [vmem:[#allocation9 + $0x178] sm:$0xff]
    %v498 = vld [vmem:[#allocation12] sm:$0x7]
    %v500 = vlaneseq
    %v501 = vshrl.u32 %v500, 7
    %v502 = vsub.s32 0, %v501
    %v503 = vrot.slane %v498, %v502
    %v504 = vlaneseq
    %v505 = vshrl.u32 %v504, 7
    %v506 = vsub.s32 1, %v505
    %v507 = vrot.slane %v498, %v506
    %v508 = vlaneseq
    %v509 = vshrl.u32 %v508, 7
    %v510 = vsub.s32 2, %v509
    %v511 = vrot.slane %v498, %v510
    %s515 = smul.u32 0, 3
    %s516 = smul.addr %s515, 8
    %s517 = scalar_lea.vmem [#allocation2], %s516
    %v518 = vld [vmem:[%s517] sm:$0xff]
    %v519 = vld [vmem:[%s517 + $0x8] sm:$0xff]
    %v520 = vld [vmem:[%s517 + $0x10] sm:$0xff]
    %521 = vmatprep.subr.mxu0 %v451
    %522 = vmatpush1.msra.mxu0 %v450
    %523 = vmatprep.subr.mxu0 %v454
    %524 = vmatpush1.msra.mxu0 %v453
    %525 = vmatprep.subr.mxu0 %v457
    %526 = vmatpush1.msra.mxu0 %v456
    %527 = vmatprep.subr.mxu0 %v460
    %528 = vmatpush1.msra.mxu0 %v459
    %529 = vmatprep.subr.mxu0 %v463
    %530 = vmatpush1.msra.mxu0 %v462
    %531 = vmatprep.subr.mxu0 %v466
    %532 = vmatpush1.msra.mxu0 %v465
    %533 = vmatprep.subr.mxu0 %v469
    %534 = vmatpush1.msra.mxu0 %v468
    %535 = vmatprep.subr.mxu0 %v472
    %536 = vmatpush1.msra.mxu0 %v471
    %537 = vmatprep.subr.mxu0 %v475
    %538 = vmatpush1.msra.mxu0 %v474
    %539 = vmatprep.subr.mxu0 %v478
    %540 = vmatpush1.msra.mxu0 %v477
    %541 = vmatprep.subr.mxu0 %v481
    %542 = vmatpush1.msra.mxu0 %v480
    %543 = vmatprep.subr.mxu0 %v484
    %544 = vmatpush1.msra.mxu0 %v483
    %545 = vmatprep.subr.mxu0 %v487
    %546 = vmatpush1.msra.mxu0 %v486
    %547 = vmatprep.subr.mxu0 %v490
    %548 = vmatpush1.msra.mxu0 %v489
    %549 = vmatprep.subr.mxu0 %v493
    %550 = vmatpush1.msra.mxu0 %v492
    %551 = vmatprep.subr.mxu0 %v496
    %552 = vmatpush1.msra.mxu0 %v495
    %553 = vmatprep.subr.mxu0 0.0
    %554 = vmatpush1.msra.mxu0 0.0
    %555 = vmatprep.subr.mxu0 0.0
    %556 = vmatpush1.msra.mxu0 0.0
    %557 = vmatprep.subr.mxu0 0.0
    %558 = vmatpush1.msra.mxu0 0.0
    %559 = vmatprep.subr.mxu0 0.0
    %560 = vmatpush1.msra.mxu0 0.0
    %561 = vmatprep.subr.mxu0 0.0
    %562 = vmatpush1.msra.mxu0 0.0
    %563 = vmatprep.subr.mxu0 0.0
    %564 = vmatpush1.msra.mxu0 0.0
    %565 = vmatprep.subr.mxu0 0.0
    %566 = vmatpush1.msra.mxu0 0.0
    %567 = vmatprep.subr.mxu0 0.0
    %568 = vmatpush1.msra.mxu0 0.0
    %569 = vmatprep.subr.mxu0 0.0
    %570 = vmatpush1.msra.mxu0 0.0
    %571 = vmatprep.subr.mxu0 0.0
    %572 = vmatpush1.msra.mxu0 0.0
    %573 = vmatprep.subr.mxu0 0.0
    %574 = vmatpush1.msra.mxu0 0.0
    %575 = vmatprep.subr.mxu0 0.0
    %576 = vmatpush1.msra.mxu0 0.0
    %577 = vmatprep.subr.mxu0 0.0
    %578 = vmatpush1.msra.mxu0 0.0
    %579 = vmatprep.subr.mxu0 0.0
    %580 = vmatpush1.msra.mxu0 0.0
    %581 = vmatprep.subr.mxu0 0.0
    %582 = vmatpush1.msra.mxu0 0.0
    %583 = vmatprep.subr.mxu0 0.0
    %584 = vmatpush1.msra.mxu0 0.0
    %585 = vmatprep.mubr.f32.mxu0 0.0
    %586 = vmatmul.mubr.f32.gmra.mrb[0].mxu0 0.0
    %v587 = vpop.f32.mrb[0].mxu0
    %v588 = vadd.f32 %v503, %v587
    %v589 = vpop.f32.mrb[0].mxu0
    %v590 = vadd.f32 %v507, %v589
    %591 = vdwg.mxu0
    %592 = vmatprep.subr.mxu0 0.0
    %593 = vmatpush1.msra.mxu0 %v452
    %594 = vmatprep.subr.mxu0 0.0
    %595 = vmatpush1.msra.mxu0 %v455
    %596 = vmatprep.subr.mxu0 0.0
    %597 = vmatpush1.msra.mxu0 %v458
    %598 = vmatprep.subr.mxu0 0.0
    %599 = vmatpush1.msra.mxu0 %v461
    %600 = vmatprep.subr.mxu0 0.0
    %601 = vmatpush1.msra.mxu0 %v464
    %602 = vmatprep.subr.mxu0 0.0
    %603 = vmatpush1.msra.mxu0 %v467
    %604 = vmatprep.subr.mxu0 0.0
    %605 = vmatpush1.msra.mxu0 %v470
    %606 = vmatprep.subr.mxu0 0.0
    %607 = vmatpush1.msra.mxu0 %v473
    %608 = vmatprep.subr.mxu0 0.0
    %609 = vmatpush1.msra.mxu0 %v476
    %610 = vmatprep.subr.mxu0 0.0
    %611 = vmatpush1.msra.mxu0 %v479
    %612 = vmatprep.subr.mxu0 0.0
    %613 = vmatpush1.msra.mxu0 %v482
    %614 = vmatprep.subr.mxu0 0.0
    %615 = vmatpush1.msra.mxu0 %v485
    %616 = vmatprep.subr.mxu0 0.0
    %617 = vmatpush1.msra.mxu0 %v488
    %618 = vmatprep.subr.mxu0 0.0
    %619 = vmatpush1.msra.mxu0 %v491
    %620 = vmatprep.subr.mxu0 0.0
    %621 = vmatpush1.msra.mxu0 %v494
    %622 = vmatprep.subr.mxu0 0.0
    %623 = vmatpush1.msra.mxu0 %v497
    %624 = vmatprep.subr.mxu0 0.0
    %625 = vmatpush1.msra.mxu0 0.0
    %626 = vmatprep.subr.mxu0 0.0
    %627 = vmatpush1.msra.mxu0 0.0
    %628 = vmatprep.subr.mxu0 0.0
    %629 = vmatpush1.msra.mxu0 0.0
    %630 = vmatprep.subr.mxu0 0.0
    %631 = vmatpush1.msra.mxu0 0.0
    %632 = vmatprep.subr.mxu0 0.0
    %633 = vmatpush1.msra.mxu0 0.0
    %634 = vmatprep.subr.mxu0 0.0
    %635 = vmatpush1.msra.mxu0 0.0
    %636 = vmatprep.subr.mxu0 0.0
    %637 = vmatpush1.msra.mxu0 0.0
    %638 = vmatprep.subr.mxu0 0.0
    %639 = vmatpush1.msra.mxu0 0.0
    %640 = vmatprep.subr.mxu0 0.0
    %641 = vmatpush1.msra.mxu0 0.0
    %642 = vmatprep.subr.mxu0 0.0
    %643 = vmatpush1.msra.mxu0 0.0
    %644 = vmatprep.subr.mxu0 0.0
    %645 = vmatpush1.msra.mxu0 0.0
    %646 = vmatprep.subr.mxu0 0.0
    %647 = vmatpush1.msra.mxu0 0.0
    %648 = vmatprep.subr.mxu0 0.0
    %649 = vmatpush1.msra.mxu0 0.0
    %650 = vmatprep.subr.mxu0 0.0
    %651 = vmatpush1.msra.mxu0 0.0
    %652 = vmatprep.subr.mxu0 0.0
    %653 = vmatpush1.msra.mxu0 0.0
    %654 = vmatprep.subr.mxu0 0.0
    %655 = vmatpush1.msra.mxu0 0.0
    %656 = vmatprep.mubr.f32.mxu0 0.0
    %657 = vmatmul.mubr.f32.gmra.mrb[0].mxu0 0.0
    %v658 = vpop.f32.mrb[0].mxu0
    %v659 = vadd.f32 %v511, %v658
    %v660 = vpop.f32.mrb[0].mxu0
    %661 = vdwg.mxu0
    %v662 = vadd.f32 %v518, %v588
    %v663 = vxor.u32 %v662, 2147483648
    %v664 = vmul.f32 %v663, 1.442695
    %v665 = vpow.pop %v664
    %v666 = vadd.f32 %v665, 1.0
    %v667 = vrcp.pop %v666
    %v668 = vmul.f32 1.0, %v667
    %v669 = vadd.f32 %v519, %v590
    %v670 = vxor.u32 %v669, 2147483648
    %v671 = vmul.f32 %v670, 1.442695
    %v672 = vpow.pop %v671
    %v673 = vadd.f32 %v672, 1.0
    %v674 = vrcp.pop %v673
    %v675 = vmul.f32 1.0, %v674
    %v676 = vmul.f32 %v668, %v659
    %v677 = vadd.f32 %v520, %v676
    %v678 = vtanh.pop %v677
    %v679 = vsub.f32 1.0, %v675
    %v680 = vmul.f32 %v679, %v678
    %v681 = vmul.f32 %v675, 0.0
    %v682 = vadd.f32 %v680, %v681
    %683 = vst [vmem:[#allocation18] sm:$0xff] %v682
    %s684 = smul.u32 1, 3
    %s685 = smul.addr %s684, 8
    %s686 = scalar_lea.vmem [#allocation2], %s685
    %v687 = vld [vmem:[%s686] sm:$0xff]
    %v688 = vld [vmem:[%s686 + $0x8] sm:$0xff]
    %v689 = vld [vmem:[%s686 + $0x10] sm:$0xff]
    %690 = vmatprep.subr.mxu0 %v451
    %691 = vmatpush1.msra.mxu0 %v450
    %692 = vmatprep.subr.mxu0 %v454
    %693 = vmatpush1.msra.mxu0 %v453
    %694 = vmatprep.subr.mxu0 %v457
    %695 = vmatpush1.msra.mxu0 %v456
    %696 = vmatprep.subr.mxu0 %v460
    %697 = vmatpush1.msra.mxu0 %v459
    %698 = vmatprep.subr.mxu0 %v463
    %699 = vmatpush1.msra.mxu0 %v462
    %700 = vmatprep.subr.mxu0 %v466
    %701 = vmatpush1.msra.mxu0 %v465
    %702 = vmatprep.subr.mxu0 %v469
    %703 = vmatpush1.msra.mxu0 %v468
    %704 = vmatprep.subr.mxu0 %v472
    %705 = vmatpush1.msra.mxu0 %v471
    %706 = vmatprep.subr.mxu0 %v475
    %707 = vmatpush1.msra.mxu0 %v474
    %708 = vmatprep.subr.mxu0 %v478
    %709 = vmatpush1.msra.mxu0 %v477
    %710 = vmatprep.subr.mxu0 %v481
    %711 = vmatpush1.msra.mxu0 %v480
    %712 = vmatprep.subr.mxu0 %v484
    %713 = vmatpush1.msra.mxu0 %v483
    %714 = vmatprep.subr.mxu0 %v487
    %715 = vmatpush1.msra.mxu0 %v486
    %716 = vmatprep.subr.mxu0 %v490
    %717 = vmatpush1.msra.mxu0 %v489
    %718 = vmatprep.subr.mxu0 %v493
    %719 = vmatpush1.msra.mxu0 %v492
    %720 = vmatprep.subr.mxu0 %v496
    %721 = vmatpush1.msra.mxu0 %v495
    %722 = vmatprep.subr.mxu0 0.0
    %723 = vmatpush1.msra.mxu0 0.0
    %724 = vmatprep.subr.mxu0 0.0
    %725 = vmatpush1.msra.mxu0 0.0
    %726 = vmatprep.subr.mxu0 0.0
    %727 = vmatpush1.msra.mxu0 0.0
    %728 = vmatprep.subr.mxu0 0.0
    %729 = vmatpush1.msra.mxu0 0.0
    %730 = vmatprep.subr.mxu0 0.0
    %731 = vmatpush1.msra.mxu0 0.0
    %732 = vmatprep.subr.mxu0 0.0
    %733 = vmatpush1.msra.mxu0 0.0
    %734 = vmatprep.subr.mxu0 0.0
    %735 = vmatpush1.msra.mxu0 0.0
    %736 = vmatprep.subr.mxu0 0.0
    %737 = vmatpush1.msra.mxu0 0.0
    %738 = vmatprep.subr.mxu0 0.0
    %739 = vmatpush1.msra.mxu0 0.0
    %740 = vmatprep.subr.mxu0 0.0
    %741 = vmatpush1.msra.mxu0 0.0
    %742 = vmatprep.subr.mxu0 0.0
    %743 = vmatpush1.msra.mxu0 0.0
    %744 = vmatprep.subr.mxu0 0.0
    %745 = vmatpush1.msra.mxu0 0.0
    %746 = vmatprep.subr.mxu0 0.0
    %747 = vmatpush1.msra.mxu0 0.0
    %748 = vmatprep.subr.mxu0 0.0
    %749 = vmatpush1.msra.mxu0 0.0
    %750 = vmatprep.subr.mxu0 0.0
    %751 = vmatpush1.msra.mxu0 0.0
    %752 = vmatprep.subr.mxu0 0.0
    %753 = vmatpush1.msra.mxu0 0.0
    %754 = vmatprep.mubr.f32.mxu0 0.0
    %755 = vmatmul.mubr.f32.gmra.mrb[0].mxu0 %v682
    %v756 = vpop.f32.mrb[0].mxu0
    %v757 = vadd.f32 %v503, %v756
    %v758 = vpop.f32.mrb[0].mxu0
    %v759 = vadd.f32 %v507, %v758
    %760 = vdwg.mxu0
    %761 = vmatprep.subr.mxu0 0.0
    %762 = vmatpush1.msra.mxu0 %v452
    %763 = vmatprep.subr.mxu0 0.0
    %764 = vmatpush1.msra.mxu0 %v455
    %765 = vmatprep.subr.mxu0 0.0
    %766 = vmatpush1.msra.mxu0 %v458
    %767 = vmatprep.subr.mxu0 0.0
    %768 = vmatpush1.msra.mxu0 %v461
    %769 = vmatprep.subr.mxu0 0.0
    %770 = vmatpush1.msra.mxu0 %v464
    %771 = vmatprep.subr.mxu0 0.0
    %772 = vmatpush1.msra.mxu0 %v467
    %773 = vmatprep.subr.mxu0 0.0
    %774 = vmatpush1.msra.mxu0 %v470
    %775 = vmatprep.subr.mxu0 0.0
    %776 = vmatpush1.msra.mxu0 %v473
    %777 = vmatprep.subr.mxu0 0.0
    %778 = vmatpush1.msra.mxu0 %v476
    %779 = vmatprep.subr.mxu0 0.0
    %780 = vmatpush1.msra.mxu0 %v479
    %781 = vmatprep.subr.mxu0 0.0
    %782 = vmatpush1.msra.mxu0 %v482
    %783 = vmatprep.subr.mxu0 0.0
    %784 = vmatpush1.msra.mxu0 %v485
    %785 = vmatprep.subr.mxu0 0.0
    %786 = vmatpush1.msra.mxu0 %v488
    %787 = vmatprep.subr.mxu0 0.0
    %788 = vmatpush1.msra.mxu0 %v491
    %789 = vmatprep.subr.mxu0 0.0
    %790 = vmatpush1.msra.mxu0 %v494
    %791 = vmatprep.subr.mxu0 0.0
    %792 = vmatpush1.msra.mxu0 %v497
    %793 = vmatprep.subr.mxu0 0.0
    %794 = vmatpush1.msra.mxu0 0.0
    %795 = vmatprep.subr.mxu0 0.0
    %796 = vmatpush1.msra.mxu0 0.0
    %797 = vmatprep.subr.mxu0 0.0
    %798 = vmatpush1.msra.mxu0 0.0
    %799 = vmatprep.subr.mxu0 0.0
    %800 = vmatpush1.msra.mxu0 0.0
    %801 = vmatprep.subr.mxu0 0.0
    %802 = vmatpush1.msra.mxu0 0.0
    %803 = vmatprep.subr.mxu0 0.0
    %804 = vmatpush1.msra.mxu0 0.0
    %805 = vmatprep.subr.mxu0 0.0
    %806 = vmatpush1.msra.mxu0 0.0
    %807 = vmatprep.subr.mxu0 0.0
    %808 = vmatpush1.msra.mxu0 0.0
    %809 = vmatprep.subr.mxu0 0.0
    %810 = vmatpush1.msra.mxu0 0.0
    %811 = vmatprep.subr.mxu0 0.0
    %812 = vmatpush1.msra.mxu0 0.0
    %813 = vmatprep.subr.mxu0 0.0
    %814 = vmatpush1.msra.mxu0 0.0
    %815 = vmatprep.subr.mxu0 0.0
    %816 = vmatpush1.msra.mxu0 0.0
    %817 = vmatprep.subr.mxu0 0.0
    %818 = vmatpush1.msra.mxu0 0.0
    %819 = vmatprep.subr.mxu0 0.0
    %820 = vmatpush1.msra.mxu0 0.0
    %821 = vmatprep.subr.mxu0 0.0
    %822 = vmatpush1.msra.mxu0 0.0
    %823 = vmatprep.subr.mxu0 0.0
    %824 = vmatpush1.msra.mxu0 0.0
    %825 = vmatprep.mubr.f32.mxu0 0.0
    %826 = vmatmul.mubr.f32.gmra.mrb[0].mxu0 %v682
    %v827 = vpop.f32.mrb[0].mxu0
    %v828 = vadd.f32 %v511, %v827
    %v829 = vpop.f32.mrb[0].mxu0
    %830 = vdwg.mxu0
    %v831 = vadd.f32 %v687, %v757
    %v832 = vxor.u32 %v831, 2147483648
    %v833 = vmul.f32 %v832, 1.442695
    %v834 = vpow.pop %v833
    %v835 = vadd.f32 %v834, 1.0
    %v836 = vrcp.pop %v835
    %v837 = vmul.f32 1.0, %v836
    %v838 = vadd.f32 %v688, %v759
    %v839 = vxor.u32 %v838, 2147483648
    %v840 = vmul.f32 %v839, 1.442695
    %v841 = vpow.pop %v840
    %v842 = vadd.f32 %v841, 1.0
    %v843 = vrcp.pop %v842
    %v844 = vmul.f32 1.0, %v843
    %v845 = vmul.f32 %v837, %v828
    %v846 = vadd.f32 %v689, %v845
    %v847 = vtanh.pop %v846
    %v848 = vsub.f32 1.0, %v844
    %v849 = vmul.f32 %v848, %v847
    %v850 = vmul.f32 %v844, %v682
    %v851 = vadd.f32 %v849, %v850
    %s852 = scalar_lea.vmem [#allocation18], 8
    %853 = vst [vmem:[%s852] sm:$0xff] %v851
    %s854 = smul.u32 2, 3
    %s855 = smul.addr %s854, 8
    %s856 = scalar_lea.vmem [#allocation2], %s855
    %v857 = vld [vmem:[%s856] sm:$0xff]
    %v858 = vld [vmem:[%s856 + $0x8] sm:$0xff]
    %v859 = vld [vmem:[%s856 + $0x10] sm:$0xff]
    %860 = vmatprep.subr.mxu0 %v451
    %861 = vmatpush1.msra.mxu0 %v450
    %862 = vmatprep.subr.mxu0 %v454
    %863 = vmatpush1.msra.mxu0 %v453
    %864 = vmatprep.subr.mxu0 %v457
    %865 = vmatpush1.msra.mxu0 %v456
    %866 = vmatprep.subr.mxu0 %v460
    %867 = vmatpush1.msra.mxu0 %v459
    %868 = vmatprep.subr.mxu0 %v463
    %869 = vmatpush1.msra.mxu0 %v462
    %870 = vmatprep.subr.mxu0 %v466
    %871 = vmatpush1.msra.mxu0 %v465
    %872 = vmatprep.subr.mxu0 %v469
    %873 = vmatpush1.msra.mxu0 %v468
    %874 = vmatprep.subr.mxu0 %v472
    %875 = vmatpush1.msra.mxu0 %v471
    %876 = vmatprep.subr.mxu0 %v475
    %877 = vmatpush1.msra.mxu0 %v474
    %878 = vmatprep.subr.mxu0 %v478
    %879 = vmatpush1.msra.mxu0 %v477
    %880 = vmatprep.subr.mxu0 %v481
    %881 = vmatpush1.msra.mxu0 %v480
    %882 = vmatprep.subr.mxu0 %v484
    %883 = vmatpush1.msra.mxu0 %v483
    %884 = vmatprep.subr.mxu0 %v487
    %885 = vmatpush1.msra.mxu0 %v486
    %886 = vmatprep.subr.mxu0 %v490
    %887 = vmatpush1.msra.mxu0 %v489
    %888 = vmatprep.subr.mxu0 %v493
    %889 = vmatpush1.msra.mxu0 %v492
    %890 = vmatprep.subr.mxu0 %v496
    %891 = vmatpush1.msra.mxu0 %v495
    %892 = vmatprep.subr.mxu0 0.0
    %893 = vmatpush1.msra.mxu0 0.0
    %894 = vmatprep.subr.mxu0 0.0
    %895 = vmatpush1.msra.mxu0 0.0
    %896 = vmatprep.subr.mxu0 0.0
    %897 = vmatpush1.msra.mxu0 0.0
    %898 = vmatprep.subr.mxu0 0.0
    %899 = vmatpush1.msra.mxu0 0.0
    %900 = vmatprep.subr.mxu0 0.0
    %901 = vmatpush1.msra.mxu0 0.0
    %902 = vmatprep.subr.mxu0 0.0
    %903 = vmatpush1.msra.mxu0 0.0
    %904 = vmatprep.subr.mxu0 0.0
    %905 = vmatpush1.msra.mxu0 0.0
    %906 = vmatprep.subr.mxu0 0.0
    %907 = vmatpush1.msra.mxu0 0.0
    %908 = vmatprep.subr.mxu0 0.0
    %909 = vmatpush1.msra.mxu0 0.0
    %910 = vmatprep.subr.mxu0 0.0
    %911 = vmatpush1.msra.mxu0 0.0
    %912 = vmatprep.subr.mxu0 0.0
    %913 = vmatpush1.msra.mxu0 0.0
    %914 = vmatprep.subr.mxu0 0.0
    %915 = vmatpush1.msra.mxu0 0.0
    %916 = vmatprep.subr.mxu0 0.0
    %917 = vmatpush1.msra.mxu0 0.0
    %918 = vmatprep.subr.mxu0 0.0
    %919 = vmatpush1.msra.mxu0 0.0
    %920 = vmatprep.subr.mxu0 0.0
    %921 = vmatpush1.msra.mxu0 0.0
    %922 = vmatprep.subr.mxu0 0.0
    %923 = vmatpush1.msra.mxu0 0.0
    %924 = vmatprep.mubr.f32.mxu0 0.0
    %925 = vmatmul.mubr.f32.gmra.mrb[0].mxu0 %v851
    %v926 = vpop.f32.mrb[0].mxu0
    %v927 = vadd.f32 %v503, %v926
    %v928 = vpop.f32.mrb[0].mxu0
    %v929 = vadd.f32 %v507, %v928
    %930 = vdwg.mxu0
    %931 = vmatprep.subr.mxu0 0.0
    %932 = vmatpush1.msra.mxu0 %v452
    %933 = vmatprep.subr.mxu0 0.0
    %934 = vmatpush1.msra.mxu0 %v455
    %935 = vmatprep.subr.mxu0 0.0
    %936 = vmatpush1.msra.mxu0 %v458
    %937 = vmatprep.subr.mxu0 0.0
    %938 = vmatpush1.msra.mxu0 %v461
    %939 = vmatprep.subr.mxu0 0.0
    %940 = vmatpush1.msra.mxu0 %v464
    %941 = vmatprep.subr.mxu0 0.0
    %942 = vmatpush1.msra.mxu0 %v467
    %943 = vmatprep.subr.mxu0 0.0
    %944 = vmatpush1.msra.mxu0 %v470
    %945 = vmatprep.subr.mxu0 0.0
    %946 = vmatpush1.msra.mxu0 %v473
    %947 = vmatprep.subr.mxu0 0.0
    %948 = vmatpush1.msra.mxu0 %v476
    %949 = vmatprep.subr.mxu0 0.0
    %950 = vmatpush1.msra.mxu0 %v479
    %951 = vmatprep.subr.mxu0 0.0
    %952 = vmatpush1.msra.mxu0 %v482
    %953 = vmatprep.subr.mxu0 0.0
    %954 = vmatpush1.msra.mxu0 %v485
    %955 = vmatprep.subr.mxu0 0.0
    %956 = vmatpush1.msra.mxu0 %v488
    %957 = vmatprep.subr.mxu0 0.0
    %958 = vmatpush1.msra.mxu0 %v491
    %959 = vmatprep.subr.mxu0 0.0
    %960 = vmatpush1.msra.mxu0 %v494
    %961 = vmatprep.subr.mxu0 0.0
    %962 = vmatpush1.msra.mxu0 %v497
    %963 = vmatprep.subr.mxu0 0.0
    %964 = vmatpush1.msra.mxu0 0.0
    %965 = vmatprep.subr.mxu0 0.0
    %966 = vmatpush1.msra.mxu0 0.0
    %967 = vmatprep.subr.mxu0 0.0
    %968 = vmatpush1.msra.mxu0 0.0
    %969 = vmatprep.subr.mxu0 0.0
    %970 = vmatpush1.msra.mxu0 0.0
    %971 = vmatprep.subr.mxu0 0.0
    %972 = vmatpush1.msra.mxu0 0.0
    %973 = vmatprep.subr.mxu0 0.0
    %974 = vmatpush1.msra.mxu0 0.0
    %975 = vmatprep.subr.mxu0 0.0
    %976 = vmatpush1.msra.mxu0 0.0
    %977 = vmatprep.subr.mxu0 0.0
    %978 = vmatpush1.msra.mxu0 0.0
    %979 = vmatprep.subr.mxu0 0.0
    %980 = vmatpush1.msra.mxu0 0.0
    %981 = vmatprep.subr.mxu0 0.0
    %982 = vmatpush1.msra.mxu0 0.0
    %983 = vmatprep.subr.mxu0 0.0
    %984 = vmatpush1.msra.mxu0 0.0
    %985 = vmatprep.subr.mxu0 0.0
    %986 = vmatpush1.msra.mxu0 0.0
    %987 = vmatprep.subr.mxu0 0.0
    %988 = vmatpush1.msra.mxu0 0.0
    %989 = vmatprep.subr.mxu0 0.0
    %990 = vmatpush1.msra.mxu0 0.0
    %991 = vmatprep.subr.mxu0 0.0
    %992 = vmatpush1.msra.mxu0 0.0
    %993 = vmatprep.subr.mxu0 0.0
    %994 = vmatpush1.msra.mxu0 0.0
    %995 = vmatprep.mubr.f32.mxu0 0.0
    %996 = vmatmul.mubr.f32.gmra.mrb[0].mxu0 %v851
    %v997 = vpop.f32.mrb[0].mxu0
    %v998 = vadd.f32 %v511, %v997
    %v999 = vpop.f32.mrb[0].mxu0
    %1000 = vdwg.mxu0
    %v1001 = vadd.f32 %v857, %v927
    %v1002 = vxor.u32 %v1001, 2147483648
    %v1003 = vmul.f32 %v1002, 1.442695
    %v1004 = vpow.pop %v1003
    %v1005 = vadd.f32 %v1004, 1.0
    %v1006 = vrcp.pop %v1005
    %v1007 = vmul.f32 1.0, %v1006
    %v1008 = vadd.f32 %v858, %v929
    %v1009 = vxor.u32 %v1008, 2147483648
    %v1010 = vmul.f32 %v1009, 1.442695
    %v1011 = vpow.pop %v1010
    %v1012 = vadd.f32 %v1011, 1.0
    %v1013 = vrcp.pop %v1012
    %v1014 = vmul.f32 1.0, %v1013
    %v1015 = vmul.f32 %v1007, %v998
    %v1016 = vadd.f32 %v859, %v1015
    %v1017 = vtanh.pop %v1016
    %v1018 = vsub.f32 1.0, %v1014
    %v1019 = vmul.f32 %v1018, %v1017
    %v1020 = vmul.f32 %v1014, %v851
    %v1021 = vadd.f32 %v1019, %v1020
    %s1022 = scalar_lea.vmem [#allocation18], 16
    %1023 = vst [vmem:[%s1022] sm:$0xff] %v1021
    %s1024 = smul.u32 3, 3
    %s1025 = smul.addr %s1024, 8
    %s1026 = scalar_lea.vmem [#allocation2], %s1025
    %v1027 = vld [vmem:[%s1026] sm:$0xff]
    %v1028 = vld [vmem:[%s1026 + $0x8] sm:$0xff]
    %v1029 = vld [vmem:[%s1026 + $0x10] sm:$0xff]
    %1030 = vmatprep.subr.mxu0 %v451
    %1031 = vmatpush1.msra.mxu0 %v450
    %1032 = vmatprep.subr.mxu0 %v454
    %1033 = vmatpush1.msra.mxu0 %v453
    %1034 = vmatprep.subr.mxu0 %v457
    %1035 = vmatpush1.msra.mxu0 %v456
    %1036 = vmatprep.subr.mxu0 %v460
    %1037 = vmatpush1.msra.mxu0 %v459
    %1038 = vmatprep.subr.mxu0 %v463
    %1039 = vmatpush1.msra.mxu0 %v462
    %1040 = vmatprep.subr.mxu0 %v466
    %1041 = vmatpush1.msra.mxu0 %v465
    %1042 = vmatprep.subr.mxu0 %v469
    %1043 = vmatpush1.msra.mxu0 %v468
    %1044 = vmatprep.subr.mxu0 %v472
    %1045 = vmatpush1.msra.mxu0 %v471
    %1046 = vmatprep.subr.mxu0 %v475
    %1047 = vmatpush1.msra.mxu0 %v474
    %1048 = vmatprep.subr.mxu0 %v478
    %1049 = vmatpush1.msra.mxu0 %v477
    %1050 = vmatprep.subr.mxu0 %v481
    %1051 = vmatpush1.msra.mxu0 %v480
    %1052 = vmatprep.subr.mxu0 %v484
    %1053 = vmatpush1.msra.mxu0 %v483
    %1054 = vmatprep.subr.mxu0 %v487
    %1055 = vmatpush1.msra.mxu0 %v486
    %1056 = vmatprep.subr.mxu0 %v490
    %1057 = vmatpush1.msra.mxu0 %v489
    %1058 = vmatprep.subr.mxu0 %v493
    %1059 = vmatpush1.msra.mxu0 %v492
    %1060 = vmatprep.subr.mxu0 %v496
    %1061 = vmatpush1.msra.mxu0 %v495
    %1062 = vmatprep.subr.mxu0 0.0
    %1063 = vmatpush1.msra.mxu0 0.0
    %1064 = vmatprep.subr.mxu0 0.0
    %1065 = vmatpush1.msra.mxu0 0.0
    %1066 = vmatprep.subr.mxu0 0.0
    %1067 = vmatpush1.msra.mxu0 0.0
    %1068 = vmatprep.subr.mxu0 0.0
    %1069 = vmatpush1.msra.mxu0 0.0
    %1070 = vmatprep.subr.mxu0 0.0
    %1071 = vmatpush1.msra.mxu0 0.0
    %1072 = vmatprep.subr.mxu0 0.0
    %1073 = vmatpush1.msra.mxu0 0.0
    %1074 = vmatprep.subr.mxu0 0.0
    %1075 = vmatpush1.msra.mxu0 0.0
    %1076 = vmatprep.subr.mxu0 0.0
    %1077 = vmatpush1.msra.mxu0 0.0
    %1078 = vmatprep.subr.mxu0 0.0
    %1079 = vmatpush1.msra.mxu0 0.0
    %1080 = vmatprep.subr.mxu0 0.0
    %1081 = vmatpush1.msra.mxu0 0.0
    %1082 = vmatprep.subr.mxu0 0.0
    %1083 = vmatpush1.msra.mxu0 0.0
    %1084 = vmatprep.subr.mxu0 0.0
    %1085 = vmatpush1.msra.mxu0 0.0
    %1086 = vmatprep.subr.mxu0 0.0
    %1087 = vmatpush1.msra.mxu0 0.0
    %1088 = vmatprep.subr.mxu0 0.0
    %1089 = vmatpush1.msra.mxu0 0.0
    %1090 = vmatprep.subr.mxu0 0.0
    %1091 = vmatpush1.msra.mxu0 0.0
    %1092 = vmatprep.subr.mxu0 0.0
    %1093 = vmatpush1.msra.mxu0 0.0
    %1094 = vmatprep.mubr.f32.mxu0 0.0
    %1095 = vmatmul.mubr.f32.gmra.mrb[0].mxu0 %v1021
    %v1096 = vpop.f32.mrb[0].mxu0
    %v1097 = vadd.f32 %v503, %v1096
    %v1098 = vpop.f32.mrb[0].mxu0
    %v1099 = vadd.f32 %v507, %v1098
    %1100 = vdwg.mxu0
    %1101 = vmatprep.subr.mxu0 0.0
    %1102 = vmatpush1.msra.mxu0 %v452
    %1103 = vmatprep.subr.mxu0 0.0
    %1104 = vmatpush1.msra.mxu0 %v455
    %1105 = vmatprep.subr.mxu0 0.0
    %1106 = vmatpush1.msra.mxu0 %v458
    %1107 = vmatprep.subr.mxu0 0.0
    %1108 = vmatpush1.msra.mxu0 %v461
    %1109 = vmatprep.subr.mxu0 0.0
    %1110 = vmatpush1.msra.mxu0 %v464
    %1111 = vmatprep.subr.mxu0 0.0
    %1112 = vmatpush1.msra.mxu0 %v467
    %1113 = vmatprep.subr.mxu0 0.0
    %1114 = vmatpush1.msra.mxu0 %v470
    %1115 = vmatprep.subr.mxu0 0.0
    %1116 = vmatpush1.msra.mxu0 %v473
    %1117 = vmatprep.subr.mxu0 0.0
    %1118 = vmatpush1.msra.mxu0 %v476
    %1119 = vmatprep.subr.mxu0 0.0
    %1120 = vmatpush1.msra.mxu0 %v479
    %1121 = vmatprep.subr.mxu0 0.0
    %1122 = vmatpush1.msra.mxu0 %v482
    %1123 = vmatprep.subr.mxu0 0.0
    %1124 = vmatpush1.msra.mxu0 %v485
    %1125 = vmatprep.subr.mxu0 0.0
    %1126 = vmatpush1.msra.mxu0 %v488
    %1127 = vmatprep.subr.mxu0 0.0
    %1128 = vmatpush1.msra.mxu0 %v491
    %1129 = vmatprep.subr.mxu0 0.0
    %1130 = vmatpush1.msra.mxu0 %v494
    %1131 = vmatprep.subr.mxu0 0.0
    %1132 = vmatpush1.msra.mxu0 %v497
    %1133 = vmatprep.subr.mxu0 0.0
    %1134 = vmatpush1.msra.mxu0 0.0
    %1135 = vmatprep.subr.mxu0 0.0
    %1136 = vmatpush1.msra.mxu0 0.0
    %1137 = vmatprep.subr.mxu0 0.0
    %1138 = vmatpush1.msra.mxu0 0.0
    %1139 = vmatprep.subr.mxu0 0.0
    %1140 = vmatpush1.msra.mxu0 0.0
    %1141 = vmatprep.subr.mxu0 0.0
    %1142 = vmatpush1.msra.mxu0 0.0
    %1143 = vmatprep.subr.mxu0 0.0
    %1144 = vmatpush1.msra.mxu0 0.0
    %1145 = vmatprep.subr.mxu0 0.0
    %1146 = vmatpush1.msra.mxu0 0.0
    %1147 = vmatprep.subr.mxu0 0.0
    %1148 = vmatpush1.msra.mxu0 0.0
    %1149 = vmatprep.subr.mxu0 0.0
    %1150 = vmatpush1.msra.mxu0 0.0
    %1151 = vmatprep.subr.mxu0 0.0
    %1152 = vmatpush1.msra.mxu0 0.0
    %1153 = vmatprep.subr.mxu0 0.0
    %1154 = vmatpush1.msra.mxu0 0.0
    %1155 = vmatprep.subr.mxu0 0.0
    %1156 = vmatpush1.msra.mxu0 0.0
    %1157 = vmatprep.subr.mxu0 0.0
    %1158 = vmatpush1.msra.mxu0 0.0
    %1159 = vmatprep.subr.mxu0 0.0
    %1160 = vmatpush1.msra.mxu0 0.0
    %1161 = vmatprep.subr.mxu0 0.0
    %1162 = vmatpush1.msra.mxu0 0.0
    %1163 = vmatprep.subr.mxu0 0.0
    %1164 = vmatpush1.msra.mxu0 0.0
    %1165 = vmatprep.mubr.f32.mxu0 0.0
    %1166 = vmatmul.mubr.f32.gmra.mrb[0].mxu0 %v1021
    %v1167 = vpop.f32.mrb[0].mxu0
    %v1168 = vadd.f32 %v511, %v1167
    %v1169 = vpop.f32.mrb[0].mxu0
    %1170 = vdwg.mxu0
    %v1171 = vadd.f32 %v1027, %v1097
    %v1172 = vxor.u32 %v1171, 2147483648
    %v1173 = vmul.f32 %v1172, 1.442695
    %v1174 = vpow.pop %v1173
    %v1175 = vadd.f32 %v1174, 1.0
    %v1176 = vrcp.pop %v1175
    %v1177 = vmul.f32 1.0, %v1176
    %v1178 = vadd.f32 %v1028, %v1099
    %v1179 = vxor.u32 %v1178, 2147483648
    %v1180 = vmul.f32 %v1179, 1.442695
    %v1181 = vpow.pop %v1180
    %v1182 = vadd.f32 %v1181, 1.0
    %v1183 = vrcp.pop %v1182
    %v1184 = vmul.f32 1.0, %v1183
    %v1185 = vmul.f32 %v1177, %v1168
    %v1186 = vadd.f32 %v1029, %v1185
    %v1187 = vtanh.pop %v1186
    %v1188 = vsub.f32 1.0, %v1184
    %v1189 = vmul.f32 %v1188, %v1187
    %v1190 = vmul.f32 %v1184, %v1021
    %v1191 = vadd.f32 %v1189, %v1190
    %s1192 = scalar_lea.vmem [#allocation18], 24
    %1193 = vst [vmem:[%s1192] sm:$0xff] %v1191
    %s1194 = smul.u32 4, 3
    %s1195 = smul.addr %s1194, 8
    %s1196 = scalar_lea.vmem [#allocation2], %s1195
    %v1197 = vld [vmem:[%s1196] sm:$0xff]
    %v1198 = vld [vmem:[%s1196 + $0x8] sm:$0xff]
    %v1199 = vld [vmem:[%s1196 + $0x10] sm:$0xff]
    %1200 = vmatprep.subr.mxu0 %v451
    %1201 = vmatpush1.msra.mxu0 %v450
    %1202 = vmatprep.subr.mxu0 %v454
    %1203 = vmatpush1.msra.mxu0 %v453
    %1204 = vmatprep.subr.mxu0 %v457
    %1205 = vmatpush1.msra.mxu0 %v456
    %1206 = vmatprep.subr.mxu0 %v460
    %1207 = vmatpush1.msra.mxu0 %v459
    %1208 = vmatprep.subr.mxu0 %v463
    %1209 = vmatpush1.msra.mxu0 %v462
    %1210 = vmatprep.subr.mxu0 %v466
    %1211 = vmatpush1.msra.mxu0 %v465
    %1212 = vmatprep.subr.mxu0 %v469
    %1213 = vmatpush1.msra.mxu0 %v468
    %1214 = vmatprep.subr.mxu0 %v472
    %1215 = vmatpush1.msra.mxu0 %v471
    %1216 = vmatprep.subr.mxu0 %v475
    %1217 = vmatpush1.msra.mxu0 %v474
    %1218 = vmatprep.subr.mxu0 %v478
    %1219 = vmatpush1.msra.mxu0 %v477
    %1220 = vmatprep.subr.mxu0 %v481
    %1221 = vmatpush1.msra.mxu0 %v480
    %1222 = vmatprep.subr.mxu0 %v484
    %1223 = vmatpush1.msra.mxu0 %v483
    %1224 = vmatprep.subr.mxu0 %v487
    %1225 = vmatpush1.msra.mxu0 %v486
    %1226 = vmatprep.subr.mxu0 %v490
    %1227 = vmatpush1.msra.mxu0 %v489
    %1228 = vmatprep.subr.mxu0 %v493
    %1229 = vmatpush1.msra.mxu0 %v492
    %1230 = vmatprep.subr.mxu0 %v496
    %1231 = vmatpush1.msra.mxu0 %v495
    %1232 = vmatprep.subr.mxu0 0.0
    %1233 = vmatpush1.msra.mxu0 0.0
    %1234 = vmatprep.subr.mxu0 0.0
    %1235 = vmatpush1.msra.mxu0 0.0
    %1236 = vmatprep.subr.mxu0 0.0
    %1237 = vmatpush1.msra.mxu0 0.0
    %1238 = vmatprep.subr.mxu0 0.0
    %1239 = vmatpush1.msra.mxu0 0.0
    %1240 = vmatprep.subr.mxu0 0.0
    %1241 = vmatpush1.msra.mxu0 0.0
    %1242 = vmatprep.subr.mxu0 0.0
    %1243 = vmatpush1.msra.mxu0 0.0
    %1244 = vmatprep.subr.mxu0 0.0
    %1245 = vmatpush1.msra.mxu0 0.0
    %1246 = vmatprep.subr.mxu0 0.0
    %1247 = vmatpush1.msra.mxu0 0.0
    %1248 = vmatprep.subr.mxu0 0.0
    %1249 = vmatpush1.msra.mxu0 0.0
    %1250 = vmatprep.subr.mxu0 0.0
    %1251 = vmatpush1.msra.mxu0 0.0
    %1252 = vmatprep.subr.mxu0 0.0
    %1253 = vmatpush1.msra.mxu0 0.0
    %1254 = vmatprep.subr.mxu0 0.0
    %1255 = vmatpush1.msra.mxu0 0.0
    %1256 = vmatprep.subr.mxu0 0.0
    %1257 = vmatpush1.msra.mxu0 0.0
    %1258 = vmatprep.subr.mxu0 0.0
    %1259 = vmatpush1.msra.mxu0 0.0
    %1260 = vmatprep.subr.mxu0 0.0
    %1261 = vmatpush1.msra.mxu0 0.0
    %1262 = vmatprep.subr.mxu0 0.0
    %1263 = vmatpush1.msra.mxu0 0.0
    %1264 = vmatprep.mubr.f32.mxu0 0.0
    %1265 = vmatmul.mubr.f32.gmra.mrb[0].mxu0 %v1191
    %v1266 = vpop.f32.mrb[0].mxu0
    %v1267 = vadd.f32 %v503, %v1266
    %v1268 = vpop.f32.mrb[0].mxu0
    %v1269 = vadd.f32 %v507, %v1268
    %1270 = vdwg.mxu0
    %1271 = vmatprep.subr.mxu0 0.0
    %1272 = vmatpush1.msra.mxu0 %v452
    %1273 = vmatprep.subr.mxu0 0.0
    %1274 = vmatpush1.msra.mxu0 %v455
    %1275 = vmatprep.subr.mxu0 0.0
    %1276 = vmatpush1.msra.mxu0 %v458
    %1277 = vmatprep.subr.mxu0 0.0
    %1278 = vmatpush1.msra.mxu0 %v461
    %1279 = vmatprep.subr.mxu0 0.0
    %1280 = vmatpush1.msra.mxu0 %v464
    %1281 = vmatprep.subr.mxu0 0.0
    %1282 = vmatpush1.msra.mxu0 %v467
    %1283 = vmatprep.subr.mxu0 0.0
    %1284 = vmatpush1.msra.mxu0 %v470
    %1285 = vmatprep.subr.mxu0 0.0
    %1286 = vmatpush1.msra.mxu0 %v473
    %1287 = vmatprep.subr.mxu0 0.0
    %1288 = vmatpush1.msra.mxu0 %v476
    %1289 = vmatprep.subr.mxu0 0.0
    %1290 = vmatpush1.msra.mxu0 %v479
    %1291 = vmatprep.subr.mxu0 0.0
    %1292 = vmatpush1.msra.mxu0 %v482
    %1293 = vmatprep.subr.mxu0 0.0
    %1294 = vmatpush1.msra.mxu0 %v485
    %1295 = vmatprep.subr.mxu0 0.0
    %1296 = vmatpush1.msra.mxu0 %v488
    %1297 = vmatprep.subr.mxu0 0.0
    %1298 = vmatpush1.msra.mxu0 %v491
    %1299 = vmatprep.subr.mxu0 0.0
    %1300 = vmatpush1.msra.mxu0 %v494
    %1301 = vmatprep.subr.mxu0 0.0
    %1302 = vmatpush1.msra.mxu0 %v497
    %1303 = vmatprep.subr.mxu0 0.0
    %1304 = vmatpush1.msra.mxu0 0.0
    %1305 = vmatprep.subr.mxu0 0.0
    %1306 = vmatpush1.msra.mxu0 0.0
    %1307 = vmatprep.subr.mxu0 0.0
    %1308 = vmatpush1.msra.mxu0 0.0
    %1309 = vmatprep.subr.mxu0 0.0
    %1310 = vmatpush1.msra.mxu0 0.0
    %1311 = vmatprep.subr.mxu0 0.0
    %1312 = vmatpush1.msra.mxu0 0.0
    %1313 = vmatprep.subr.mxu0 0.0
    %1314 = vmatpush1.msra.mxu0 0.0
    %1315 = vmatprep.subr.mxu0 0.0
    %1316 = vmatpush1.msra.mxu0 0.0
    %1317 = vmatprep.subr.mxu0 0.0
    %1318 = vmatpush1.msra.mxu0 0.0
    %1319 = vmatprep.subr.mxu0 0.0
    %1320 = vmatpush1.msra.mxu0 0.0
    %1321 = vmatprep.subr.mxu0 0.0
    %1322 = vmatpush1.msra.mxu0 0.0
    %1323 = vmatprep.subr.mxu0 0.0
    %1324 = vmatpush1.msra.mxu0 0.0
    %1325 = vmatprep.subr.mxu0 0.0
    %1326 = vmatpush1.msra.mxu0 0.0
    %1327 = vmatprep.subr.mxu0 0.0
    %1328 = vmatpush1.msra.mxu0 0.0
    %1329 = vmatprep.subr.mxu0 0.0
    %1330 = vmatpush1.msra.mxu0 0.0
    %1331 = vmatprep.subr.mxu0 0.0
    %1332 = vmatpush1.msra.mxu0 0.0
    %1333 = vmatprep.subr.mxu0 0.0
    %1334 = vmatpush1.msra.mxu0 0.0
    %1335 = vmatprep.mubr.f32.mxu0 0.0
    %1336 = vmatmul.mubr.f32.gmra.mrb[0].mxu0 %v1191
    %v1337 = vpop.f32.mrb[0].mxu0
    %v1338 = vadd.f32 %v511, %v1337
    %v1339 = vpop.f32.mrb[0].mxu0
    %1340 = vdwg.mxu0
    %v1341 = vadd.f32 %v1197, %v1267
    %v1342 = vxor.u32 %v1341, 2147483648
    %v1343 = vmul.f32 %v1342, 1.442695
    %v1344 = vpow.pop %v1343
    %v1345 = vadd.f32 %v1344, 1.0
    %v1346 = vrcp.pop %v1345
    %v1347 = vmul.f32 1.0, %v1346
    %v1348 = vadd.f32 %v1198, %v1269
    %v1349 = vxor.u32 %v1348, 2147483648
    %v1350 = vmul.f32 %v1349, 1.442695
    %v1351 = vpow.pop %v1350
    %v1352 = vadd.f32 %v1351, 1.0
    %v1353 = vrcp.pop %v1352
    %v1354 = vmul.f32 1.0, %v1353
    %v1355 = vmul.f32 %v1347, %v1338
    %v1356 = vadd.f32 %v1199, %v1355
    %v1357 = vtanh.pop %v1356
    %v1358 = vsub.f32 1.0, %v1354
    %v1359 = vmul.f32 %v1358, %v1357
    %v1360 = vmul.f32 %v1354, %v1191
    %v1361 = vadd.f32 %v1359, %v1360
    %s1362 = scalar_lea.vmem [#allocation18], 32
    %1363 = vst [vmem:[%s1362] sm:$0xff] %v1361
    %s1364 = smul.u32 5, 3
    %s1365 = smul.addr %s1364, 8
    %s1366 = scalar_lea.vmem [#allocation2], %s1365
    %v1367 = vld [vmem:[%s1366] sm:$0xff]
    %v1368 = vld [vmem:[%s1366 + $0x8] sm:$0xff]
    %v1369 = vld [vmem:[%s1366 + $0x10] sm:$0xff]
    %1370 = vmatprep.subr.mxu0 %v451
    %1371 = vmatpush1.msra.mxu0 %v450
    %1372 = vmatprep.subr.mxu0 %v454
    %1373 = vmatpush1.msra.mxu0 %v453
    %1374 = vmatprep.subr.mxu0 %v457
    %1375 = vmatpush1.msra.mxu0 %v456
    %1376 = vmatprep.subr.mxu0 %v460
    %1377 = vmatpush1.msra.mxu0 %v459
    %1378 = vmatprep.subr.mxu0 %v463
    %1379 = vmatpush1.msra.mxu0 %v462
    %1380 = vmatprep.subr.mxu0 %v466
    %1381 = vmatpush1.msra.mxu0 %v465
    %1382 = vmatprep.subr.mxu0 %v469
    %1383 = vmatpush1.msra.mxu0 %v468
    %1384 = vmatprep.subr.mxu0 %v472
    %1385 = vmatpush1.msra.mxu0 %v471
    %1386 = vmatprep.subr.mxu0 %v475
    %1387 = vmatpush1.msra.mxu0 %v474
    %1388 = vmatprep.subr.mxu0 %v478
    %1389 = vmatpush1.msra.mxu0 %v477
    %1390 = vmatprep.subr.mxu0 %v481
    %1391 = vmatpush1.msra.mxu0 %v480
    %1392 = vmatprep.subr.mxu0 %v484
    %1393 = vmatpush1.msra.mxu0 %v483
    %1394 = vmatprep.subr.mxu0 %v487
    %1395 = vmatpush1.msra.mxu0 %v486
    %1396 = vmatprep.subr.mxu0 %v490
    %1397 = vmatpush1.msra.mxu0 %v489
    %1398 = vmatprep.subr.mxu0 %v493
    %1399 = vmatpush1.msra.mxu0 %v492
    %1400 = vmatprep.subr.mxu0 %v496
    %1401 = vmatpush1.msra.mxu0 %v495
    %1402 = vmatprep.subr.mxu0 0.0
    %1403 = vmatpush1.msra.mxu0 0.0
    %1404 = vmatprep.subr.mxu0 0.0
    %1405 = vmatpush1.msra.mxu0 0.0
    %1406 = vmatprep.subr.mxu0 0.0
    %1407 = vmatpush1.msra.mxu0 0.0
    %1408 = vmatprep.subr.mxu0 0.0
    %1409 = vmatpush1.msra.mxu0 0.0
    %1410 = vmatprep.subr.mxu0 0.0
    %1411 = vmatpush1.msra.mxu0 0.0
    %1412 = vmatprep.subr.mxu0 0.0
    %1413 = vmatpush1.msra.mxu0 0.0
    %1414 = vmatprep.subr.mxu0 0.0
    %1415 = vmatpush1.msra.mxu0 0.0
    %1416 = vmatprep.subr.mxu0 0.0
    %1417 = vmatpush1.msra.mxu0 0.0
    %1418 = vmatprep.subr.mxu0 0.0
    %1419 = vmatpush1.msra.mxu0 0.0
    %1420 = vmatprep.subr.mxu0 0.0
    %1421 = vmatpush1.msra.mxu0 0.0
    %1422 = vmatprep.subr.mxu0 0.0
    %1423 = vmatpush1.msra.mxu0 0.0
    %1424 = vmatprep.subr.mxu0 0.0
    %1425 = vmatpush1.msra.mxu0 0.0
    %1426 = vmatprep.subr.mxu0 0.0
    %1427 = vmatpush1.msra.mxu0 0.0
    %1428 = vmatprep.subr.mxu0 0.0
    %1429 = vmatpush1.msra.mxu0 0.0
    %1430 = vmatprep.subr.mxu0 0.0
    %1431 = vmatpush1.msra.mxu0 0.0
    %1432 = vmatprep.subr.mxu0 0.0
    %1433 = vmatpush1.msra.mxu0 0.0
    %1434 = vmatprep.mubr.f32.mxu0 0.0
    %1435 = vmatmul.mubr.f32.gmra.mrb[0].mxu0 %v1361
    %v1436 = vpop.f32.mrb[0].mxu0
    %v1437 = vadd.f32 %v503, %v1436
    %v1438 = vpop.f32.mrb[0].mxu0
    %v1439 = vadd.f32 %v507, %v1438
    %1440 = vdwg.mxu0
    %1441 = vmatprep.subr.mxu0 0.0
    %1442 = vmatpush1.msra.mxu0 %v452
    %1443 = vmatprep.subr.mxu0 0.0
    %1444 = vmatpush1.msra.mxu0 %v455
    %1445 = vmatprep.subr.mxu0 0.0
    %1446 = vmatpush1.msra.mxu0 %v458
    %1447 = vmatprep.subr.mxu0 0.0
    %1448 = vmatpush1.msra.mxu0 %v461
    %1449 = vmatprep.subr.mxu0 0.0
    %1450 = vmatpush1.msra.mxu0 %v464
    %1451 = vmatprep.subr.mxu0 0.0
    %1452 = vmatpush1.msra.mxu0 %v467
    %1453 = vmatprep.subr.mxu0 0.0
    %1454 = vmatpush1.msra.mxu0 %v470
    %1455 = vmatprep.subr.mxu0 0.0
    %1456 = vmatpush1.msra.mxu0 %v473
    %1457 = vmatprep.subr.mxu0 0.0
    %1458 = vmatpush1.msra.mxu0 %v476
    %1459 = vmatprep.subr.mxu0 0.0
    %1460 = vmatpush1.msra.mxu0 %v479
    %1461 = vmatprep.subr.mxu0 0.0
    %1462 = vmatpush1.msra.mxu0 %v482
    %1463 = vmatprep.subr.mxu0 0.0
    %1464 = vmatpush1.msra.mxu0 %v485
    %1465 = vmatprep.subr.mxu0 0.0
    %1466 = vmatpush1.msra.mxu0 %v488
    %1467 = vmatprep.subr.mxu0 0.0
    %1468 = vmatpush1.msra.mxu0 %v491
    %1469 = vmatprep.subr.mxu0 0.0
    %1470 = vmatpush1.msra.mxu0 %v494
    %1471 = vmatprep.subr.mxu0 0.0
    %1472 = vmatpush1.msra.mxu0 %v497
    %1473 = vmatprep.subr.mxu0 0.0
    %1474 = vmatpush1.msra.mxu0 0.0
    %1475 = vmatprep.subr.mxu0 0.0
    %1476 = vmatpush1.msra.mxu0 0.0
    %1477 = vmatprep.subr.mxu0 0.0
    %1478 = vmatpush1.msra.mxu0 0.0
    %1479 = vmatprep.subr.mxu0 0.0
    %1480 = vmatpush1.msra.mxu0 0.0
    %1481 = vmatprep.subr.mxu0 0.0
    %1482 = vmatpush1.msra.mxu0 0.0
    %1483 = vmatprep.subr.mxu0 0.0
    %1484 = vmatpush1.msra.mxu0 0.0
    %1485 = vmatprep.subr.mxu0 0.0
    %1486 = vmatpush1.msra.mxu0 0.0
    %1487 = vmatprep.subr.mxu0 0.0
    %1488 = vmatpush1.msra.mxu0 0.0
    %1489 = vmatprep.subr.mxu0 0.0
    %1490 = vmatpush1.msra.mxu0 0.0
    %1491 = vmatprep.subr.mxu0 0.0
    %1492 = vmatpush1.msra.mxu0 0.0
    %1493 = vmatprep.subr.mxu0 0.0
    %1494 = vmatpush1.msra.mxu0 0.0
    %1495 = vmatprep.subr.mxu0 0.0
    %1496 = vmatpush1.msra.mxu0 0.0
    %1497 = vmatprep.subr.mxu0 0.0
    %1498 = vmatpush1.msra.mxu0 0.0
    %1499 = vmatprep.subr.mxu0 0.0
    %1500 = vmatpush1.msra.mxu0 0.0
    %1501 = vmatprep.subr.mxu0 0.0
    %1502 = vmatpush1.msra.mxu0 0.0
    %1503 = vmatprep.subr.mxu0 0.0
    %1504 = vmatpush1.msra.mxu0 0.0
    %1505 = vmatprep.mubr.f32.mxu0 0.0
    %1506 = vmatmul.mubr.f32.gmra.mrb[0].mxu0 %v1361
    %v1507 = vpop.f32.mrb[0].mxu0
    %v1508 = vadd.f32 %v511, %v1507
    %v1509 = vpop.f32.mrb[0].mxu0
    %1510 = vdwg.mxu0
    %v1511 = vadd.f32 %v1367, %v1437
    %v1512 = vxor.u32 %v1511, 2147483648
    %v1513 = vmul.f32 %v1512, 1.442695
    %v1514 = vpow.pop %v1513
    %v1515 = vadd.f32 %v1514, 1.0
    %v1516 = vrcp.pop %v1515
    %v1517 = vmul.f32 1.0, %v1516
    %v1518 = vadd.f32 %v1368, %v1439
    %v1519 = vxor.u32 %v1518, 2147483648
    %v1520 = vmul.f32 %v1519, 1.442695
    %v1521 = vpow.pop %v1520
    %v1522 = vadd.f32 %v1521, 1.0
    %v1523 = vrcp.pop %v1522
    %v1524 = vmul.f32 1.0, %v1523
    %v1525 = vmul.f32 %v1517, %v1508
    %v1526 = vadd.f32 %v1369, %v1525
    %v1527 = vtanh.pop %v1526
    %v1528 = vsub.f32 1.0, %v1524
    %v1529 = vmul.f32 %v1528, %v1527
    %v1530 = vmul.f32 %v1524, %v1361
    %v1531 = vadd.f32 %v1529, %v1530
    %s1532 = scalar_lea.vmem [#allocation18], 40
    %1533 = vst [vmem:[%s1532] sm:$0xff] %v1531
    %s1534 = smul.u32 6, 3
    %s1535 = smul.addr %s1534, 8
    %s1536 = scalar_lea.vmem [#allocation2], %s1535
    %v1537 = vld [vmem:[%s1536] sm:$0xff]
    %v1538 = vld [vmem:[%s1536 + $0x8] sm:$0xff]
    %v1539 = vld [vmem:[%s1536 + $0x10] sm:$0xff]
    %1540 = vmatprep.subr.mxu0 %v451
    %1541 = vmatpush1.msra.mxu0 %v450
    %1542 = vmatprep.subr.mxu0 %v454
    %1543 = vmatpush1.msra.mxu0 %v453
    %1544 = vmatprep.subr.mxu0 %v457
    %1545 = vmatpush1.msra.mxu0 %v456
    %1546 = vmatprep.subr.mxu0 %v460
    %1547 = vmatpush1.msra.mxu0 %v459
    %1548 = vmatprep.subr.mxu0 %v463
    %1549 = vmatpush1.msra.mxu0 %v462
    %1550 = vmatprep.subr.mxu0 %v466
    %1551 = vmatpush1.msra.mxu0 %v465
    %1552 = vmatprep.subr.mxu0 %v469
    %1553 = vmatpush1.msra.mxu0 %v468
    %1554 = vmatprep.subr.mxu0 %v472
    %1555 = vmatpush1.msra.mxu0 %v471
    %1556 = vmatprep.subr.mxu0 %v475
    %1557 = vmatpush1.msra.mxu0 %v474
    %1558 = vmatprep.subr.mxu0 %v478
    %1559 = vmatpush1.msra.mxu0 %v477
    %1560 = vmatprep.subr.mxu0 %v481
    %1561 = vmatpush1.msra.mxu0 %v480
    %1562 = vmatprep.subr.mxu0 %v484
    %1563 = vmatpush1.msra.mxu0 %v483
    %1564 = vmatprep.subr.mxu0 %v487
    %1565 = vmatpush1.msra.mxu0 %v486
    %1566 = vmatprep.subr.mxu0 %v490
    %1567 = vmatpush1.msra.mxu0 %v489
    %1568 = vmatprep.subr.mxu0 %v493
    %1569 = vmatpush1.msra.mxu0 %v492
    %1570 = vmatprep.subr.mxu0 %v496
    %1571 = vmatpush1.msra.mxu0 %v495
    %1572 = vmatprep.subr.mxu0 0.0
    %1573 = vmatpush1.msra.mxu0 0.0
    %1574 = vmatprep.subr.mxu0 0.0
    %1575 = vmatpush1.msra.mxu0 0.0
    %1576 = vmatprep.subr.mxu0 0.0
    %1577 = vmatpush1.msra.mxu0 0.0
    %1578 = vmatprep.subr.mxu0 0.0
    %1579 = vmatpush1.msra.mxu0 0.0
    %1580 = vmatprep.subr.mxu0 0.0
    %1581 = vmatpush1.msra.mxu0 0.0
    %1582 = vmatprep.subr.mxu0 0.0
    %1583 = vmatpush1.msra.mxu0 0.0
    %1584 = vmatprep.subr.mxu0 0.0
    %1585 = vmatpush1.msra.mxu0 0.0
    %1586 = vmatprep.subr.mxu0 0.0
    %1587 = vmatpush1.msra.mxu0 0.0
    %1588 = vmatprep.subr.mxu0 0.0
    %1589 = vmatpush1.msra.mxu0 0.0
    %1590 = vmatprep.subr.mxu0 0.0
    %1591 = vmatpush1.msra.mxu0 0.0
    %1592 = vmatprep.subr.mxu0 0.0
    %1593 = vmatpush1.msra.mxu0 0.0
    %1594 = vmatprep.subr.mxu0 0.0
    %1595 = vmatpush1.msra.mxu0 0.0
    %1596 = vmatprep.subr.mxu0 0.0
    %1597 = vmatpush1.msra.mxu0 0.0
    %1598 = vmatprep.subr.mxu0 0.0
    %1599 = vmatpush1.msra.mxu0 0.0
    %1600 = vmatprep.subr.mxu0 0.0
    %1601 = vmatpush1.msra.mxu0 0.0
    %1602 = vmatprep.subr.mxu0 0.0
    %1603 = vmatpush1.msra.mxu0 0.0
    %1604 = vmatprep.mubr.f32.mxu0 0.0
    %1605 = vmatmul.mubr.f32.gmra.mrb[0].mxu0 %v1531
    %v1606 = vpop.f32.mrb[0].mxu0
    %v1607 = vadd.f32 %v503, %v1606
    %v1608 = vpop.f32.mrb[0].mxu0
    %v1609 = vadd.f32 %v507, %v1608
    %1610 = vdwg.mxu0
    %1611 = vmatprep.subr.mxu0 0.0
    %1612 = vmatpush1.msra.mxu0 %v452
    %1613 = vmatprep.subr.mxu0 0.0
    %1614 = vmatpush1.msra.mxu0 %v455
    %1615 = vmatprep.subr.mxu0 0.0
    %1616 = vmatpush1.msra.mxu0 %v458
    %1617 = vmatprep.subr.mxu0 0.0
    %1618 = vmatpush1.msra.mxu0 %v461
    %1619 = vmatprep.subr.mxu0 0.0
    %1620 = vmatpush1.msra.mxu0 %v464
    %1621 = vmatprep.subr.mxu0 0.0
    %1622 = vmatpush1.msra.mxu0 %v467
    %1623 = vmatprep.subr.mxu0 0.0
    %1624 = vmatpush1.msra.mxu0 %v470
    %1625 = vmatprep.subr.mxu0 0.0
    %1626 = vmatpush1.msra.mxu0 %v473
    %1627 = vmatprep.subr.mxu0 0.0
    %1628 = vmatpush1.msra.mxu0 %v476
    %1629 = vmatprep.subr.mxu0 0.0
    %1630 = vmatpush1.msra.mxu0 %v479
    %1631 = vmatprep.subr.mxu0 0.0
    %1632 = vmatpush1.msra.mxu0 %v482
    %1633 = vmatprep.subr.mxu0 0.0
    %1634 = vmatpush1.msra.mxu0 %v485
    %1635 = vmatprep.subr.mxu0 0.0
    %1636 = vmatpush1.msra.mxu0 %v488
    %1637 = vmatprep.subr.mxu0 0.0
    %1638 = vmatpush1.msra.mxu0 %v491
    %1639 = vmatprep.subr.mxu0 0.0
    %1640 = vmatpush1.msra.mxu0 %v494
    %1641 = vmatprep.subr.mxu0 0.0
    %1642 = vmatpush1.msra.mxu0 %v497
    %1643 = vmatprep.subr.mxu0 0.0
    %1644 = vmatpush1.msra.mxu0 0.0
    %1645 = vmatprep.subr.mxu0 0.0
    %1646 = vmatpush1.msra.mxu0 0.0
    %1647 = vmatprep.subr.mxu0 0.0
    %1648 = vmatpush1.msra.mxu0 0.0
    %1649 = vmatprep.subr.mxu0 0.0
    %1650 = vmatpush1.msra.mxu0 0.0
    %1651 = vmatprep.subr.mxu0 0.0
    %1652 = vmatpush1.msra.mxu0 0.0
    %1653 = vmatprep.subr.mxu0 0.0
    %1654 = vmatpush1.msra.mxu0 0.0
    %1655 = vmatprep.subr.mxu0 0.0
    %1656 = vmatpush1.msra.mxu0 0.0
    %1657 = vmatprep.subr.mxu0 0.0
    %1658 = vmatpush1.msra.mxu0 0.0
    %1659 = vmatprep.subr.mxu0 0.0
    %1660 = vmatpush1.msra.mxu0 0.0
    %1661 = vmatprep.subr.mxu0 0.0
    %1662 = vmatpush1.msra.mxu0 0.0
    %1663 = vmatprep.subr.mxu0 0.0
    %1664 = vmatpush1.msra.mxu0 0.0
    %1665 = vmatprep.subr.mxu0 0.0
    %1666 = vmatpush1.msra.mxu0 0.0
    %1667 = vmatprep.subr.mxu0 0.0
    %1668 = vmatpush1.msra.mxu0 0.0
    %1669 = vmatprep.subr.mxu0 0.0
    %1670 = vmatpush1.msra.mxu0 0.0
    %1671 = vmatprep.subr.mxu0 0.0
    %1672 = vmatpush1.msra.mxu0 0.0
    %1673 = vmatprep.subr.mxu0 0.0
    %1674 = vmatpush1.msra.mxu0 0.0
    %1675 = vmatprep.mubr.f32.mxu0 0.0
    %1676 = vmatmul.mubr.f32.gmra.mrb[0].mxu0 %v1531
    %v1677 = vpop.f32.mrb[0].mxu0
    %v1678 = vadd.f32 %v511, %v1677
    %v1679 = vpop.f32.mrb[0].mxu0
    %1680 = vdwg.mxu0
    %v1681 = vadd.f32 %v1537, %v1607
    %v1682 = vxor.u32 %v1681, 2147483648
    %v1683 = vmul.f32 %v1682, 1.442695
    %v1684 = vpow.pop %v1683
    %v1685 = vadd.f32 %v1684, 1.0
    %v1686 = vrcp.pop %v1685
    %v1687 = vmul.f32 1.0, %v1686
    %v1688 = vadd.f32 %v1538, %v1609
    %v1689 = vxor.u32 %v1688, 2147483648
    %v1690 = vmul.f32 %v1689, 1.442695
    %v1691 = vpow.pop %v1690
    %v1692 = vadd.f32 %v1691, 1.0
    %v1693 = vrcp.pop %v1692
    %v1694 = vmul.f32 1.0, %v1693
    %v1695 = vmul.f32 %v1687, %v1678
    %v1696 = vadd.f32 %v1539, %v1695
    %v1697 = vtanh.pop %v1696
    %v1698 = vsub.f32 1.0, %v1694
    %v1699 = vmul.f32 %v1698, %v1697
    %v1700 = vmul.f32 %v1694, %v1531
    %v1701 = vadd.f32 %v1699, %v1700
    %s1702 = scalar_lea.vmem [#allocation18], 48
    %1703 = vst [vmem:[%s1702] sm:$0xff] %v1701
    %s1704 = smul.u32 7, 3
    %s1705 = smul.addr %s1704, 8
    %s1706 = scalar_lea.vmem [#allocation2], %s1705
    %v1707 = vld [vmem:[%s1706] sm:$0xff]
    %v1708 = vld [vmem:[%s1706 + $0x8] sm:$0xff]
    %v1709 = vld [vmem:[%s1706 + $0x10] sm:$0xff]
    %1710 = vmatprep.subr.mxu0 %v451
    %1711 = vmatpush1.msra.mxu0 %v450
    %1712 = vmatprep.subr.mxu0 %v454
    %1713 = vmatpush1.msra.mxu0 %v453
    %1714 = vmatprep.subr.mxu0 %v457
    %1715 = vmatpush1.msra.mxu0 %v456
    %1716 = vmatprep.subr.mxu0 %v460
    %1717 = vmatpush1.msra.mxu0 %v459
    %1718 = vmatprep.subr.mxu0 %v463
    %1719 = vmatpush1.msra.mxu0 %v462
    %1720 = vmatprep.subr.mxu0 %v466
    %1721 = vmatpush1.msra.mxu0 %v465
    %1722 = vmatprep.subr.mxu0 %v469
    %1723 = vmatpush1.msra.mxu0 %v468
    %1724 = vmatprep.subr.mxu0 %v472
    %1725 = vmatpush1.msra.mxu0 %v471
    %1726 = vmatprep.subr.mxu0 %v475
    %1727 = vmatpush1.msra.mxu0 %v474
    %1728 = vmatprep.subr.mxu0 %v478
    %1729 = vmatpush1.msra.mxu0 %v477
    %1730 = vmatprep.subr.mxu0 %v481
    %1731 = vmatpush1.msra.mxu0 %v480
    %1732 = vmatprep.subr.mxu0 %v484
    %1733 = vmatpush1.msra.mxu0 %v483
    %1734 = vmatprep.subr.mxu0 %v487
    %1735 = vmatpush1.msra.mxu0 %v486
    %1736 = vmatprep.subr.mxu0 %v490
    %1737 = vmatpush1.msra.mxu0 %v489
    %1738 = vmatprep.subr.mxu0 %v493
    %1739 = vmatpush1.msra.mxu0 %v492
    %1740 = vmatprep.subr.mxu0 %v496
    %1741 = vmatpush1.msra.mxu0 %v495
    %1742 = vmatprep.subr.mxu0 0.0
    %1743 = vmatpush1.msra.mxu0 0.0
    %1744 = vmatprep.subr.mxu0 0.0
    %1745 = vmatpush1.msra.mxu0 0.0
    %1746 = vmatprep.subr.mxu0 0.0
    %1747 = vmatpush1.msra.mxu0 0.0
    %1748 = vmatprep.subr.mxu0 0.0
    %1749 = vmatpush1.msra.mxu0 0.0
    %1750 = vmatprep.subr.mxu0 0.0
    %1751 = vmatpush1.msra.mxu0 0.0
    %1752 = vmatprep.subr.mxu0 0.0
    %1753 = vmatpush1.msra.mxu0 0.0
    %1754 = vmatprep.subr.mxu0 0.0
    %1755 = vmatpush1.msra.mxu0 0.0
    %1756 = vmatprep.subr.mxu0 0.0
    %1757 = vmatpush1.msra.mxu0 0.0
    %1758 = vmatprep.subr.mxu0 0.0
    %1759 = vmatpush1.msra.mxu0 0.0
    %1760 = vmatprep.subr.mxu0 0.0
    %1761 = vmatpush1.msra.mxu0 0.0
    %1762 = vmatprep.subr.mxu0 0.0
    %1763 = vmatpush1.msra.mxu0 0.0
    %1764 = vmatprep.subr.mxu0 0.0
    %1765 = vmatpush1.msra.mxu0 0.0
    %1766 = vmatprep.subr.mxu0 0.0
    %1767 = vmatpush1.msra.mxu0 0.0
    %1768 = vmatprep.subr.mxu0 0.0
    %1769 = vmatpush1.msra.mxu0 0.0
    %1770 = vmatprep.subr.mxu0 0.0
    %1771 = vmatpush1.msra.mxu0 0.0
    %1772 = vmatprep.subr.mxu0 0.0
    %1773 = vmatpush1.msra.mxu0 0.0
    %1774 = vmatprep.mubr.f32.mxu0 0.0
    %1775 = vmatmul.mubr.f32.gmra.mrb[0].mxu0 %v1701
    %v1776 = vpop.f32.mrb[0].mxu0
    %v1777 = vadd.f32 %v503, %v1776
    %v1778 = vpop.f32.mrb[0].mxu0
    %v1779 = vadd.f32 %v507, %v1778
    %1780 = vdwg.mxu0
    %1781 = vmatprep.subr.mxu0 0.0
    %1782 = vmatpush1.msra.mxu0 %v452
    %1783 = vmatprep.subr.mxu0 0.0
    %1784 = vmatpush1.msra.mxu0 %v455
    %1785 = vmatprep.subr.mxu0 0.0
    %1786 = vmatpush1.msra.mxu0 %v458
    %1787 = vmatprep.subr.mxu0 0.0
    %1788 = vmatpush1.msra.mxu0 %v461
    %1789 = vmatprep.subr.mxu0 0.0
    %1790 = vmatpush1.msra.mxu0 %v464
    %1791 = vmatprep.subr.mxu0 0.0
    %1792 = vmatpush1.msra.mxu0 %v467
    %1793 = vmatprep.subr.mxu0 0.0
    %1794 = vmatpush1.msra.mxu0 %v470
    %1795 = vmatprep.subr.mxu0 0.0
    %1796 = vmatpush1.msra.mxu0 %v473
    %1797 = vmatprep.subr.mxu0 0.0
    %1798 = vmatpush1.msra.mxu0 %v476
    %1799 = vmatprep.subr.mxu0 0.0
    %1800 = vmatpush1.msra.mxu0 %v479
    %1801 = vmatprep.subr.mxu0 0.0
    %1802 = vmatpush1.msra.mxu0 %v482
    %1803 = vmatprep.subr.mxu0 0.0
    %1804 = vmatpush1.msra.mxu0 %v485
    %1805 = vmatprep.subr.mxu0 0.0
    %1806 = vmatpush1.msra.mxu0 %v488
    %1807 = vmatprep.subr.mxu0 0.0
    %1808 = vmatpush1.msra.mxu0 %v491
    %1809 = vmatprep.subr.mxu0 0.0
    %1810 = vmatpush1.msra.mxu0 %v494
    %1811 = vmatprep.subr.mxu0 0.0
    %1812 = vmatpush1.msra.mxu0 %v497
    %1813 = vmatprep.subr.mxu0 0.0
    %1814 = vmatpush1.msra.mxu0 0.0
    %1815 = vmatprep.subr.mxu0 0.0
    %1816 = vmatpush1.msra.mxu0 0.0
    %1817 = vmatprep.subr.mxu0 0.0
    %1818 = vmatpush1.msra.mxu0 0.0
    %1819 = vmatprep.subr.mxu0 0.0
    %1820 = vmatpush1.msra.mxu0 0.0
    %1821 = vmatprep.subr.mxu0 0.0
    %1822 = vmatpush1.msra.mxu0 0.0
    %1823 = vmatprep.subr.mxu0 0.0
    %1824 = vmatpush1.msra.mxu0 0.0
    %1825 = vmatprep.subr.mxu0 0.0
    %1826 = vmatpush1.msra.mxu0 0.0
    %1827 = vmatprep.subr.mxu0 0.0
    %1828 = vmatpush1.msra.mxu0 0.0
    %1829 = vmatprep.subr.mxu0 0.0
    %1830 = vmatpush1.msra.mxu0 0.0
    %1831 = vmatprep.subr.mxu0 0.0
    %1832 = vmatpush1.msra.mxu0 0.0
    %1833 = vmatprep.subr.mxu0 0.0
    %1834 = vmatpush1.msra.mxu0 0.0
    %1835 = vmatprep.subr.mxu0 0.0
    %1836 = vmatpush1.msra.mxu0 0.0
    %1837 = vmatprep.subr.mxu0 0.0
    %1838 = vmatpush1.msra.mxu0 0.0
    %1839 = vmatprep.subr.mxu0 0.0
    %1840 = vmatpush1.msra.mxu0 0.0
    %1841 = vmatprep.subr.mxu0 0.0
    %1842 = vmatpush1.msra.mxu0 0.0
    %1843 = vmatprep.subr.mxu0 0.0
    %1844 = vmatpush1.msra.mxu0 0.0
    %1845 = vmatprep.mubr.f32.mxu0 0.0
    %1846 = vmatmul.mubr.f32.gmra.mrb[0].mxu0 %v1701
    %v1847 = vpop.f32.mrb[0].mxu0
    %v1848 = vadd.f32 %v511, %v1847
    %v1849 = vpop.f32.mrb[0].mxu0
    %1850 = vdwg.mxu0
    %v1851 = vadd.f32 %v1707, %v1777
    %v1852 = vxor.u32 %v1851, 2147483648
    %v1853 = vmul.f32 %v1852, 1.442695
    %v1854 = vpow.pop %v1853
    %v1855 = vadd.f32 %v1854, 1.0
    %v1856 = vrcp.pop %v1855
    %v1857 = vmul.f32 1.0, %v1856
    %v1858 = vadd.f32 %v1708, %v1779
    %v1859 = vxor.u32 %v1858, 2147483648
    %v1860 = vmul.f32 %v1859, 1.442695
    %v1861 = vpow.pop %v1860
    %v1862 = vadd.f32 %v1861, 1.0
    %v1863 = vrcp.pop %v1862
    %v1864 = vmul.f32 1.0, %v1863
    %v1865 = vmul.f32 %v1857, %v1848
    %v1866 = vadd.f32 %v1709, %v1865
    %v1867 = vtanh.pop %v1866
    %v1868 = vsub.f32 1.0, %v1864
    %v1869 = vmul.f32 %v1868, %v1867
    %v1870 = vmul.f32 %v1864, %v1701
    %v1871 = vadd.f32 %v1869, %v1870
    %s1872 = scalar_lea.vmem [#allocation18], 56
    %1873 = vst [vmem:[%s1872] sm:$0xff] %v1871
    %v1874 = vld [vmem:[#allocation14] sm:$0xff]
    %v1875 = vld [vmem:[#allocation14 + $0x8] sm:$0xff]
    %v1876 = vld [vmem:[#allocation14 + $0x10] sm:$0xff]
    %v1877 = vld [vmem:[#allocation14 + $0x18] sm:$0xff]
    %v1878 = vld [vmem:[#allocation14 + $0x20] sm:$0xff]
    %v1879 = vld [vmem:[#allocation14 + $0x28] sm:$0xff]
    %v1880 = vld [vmem:[#allocation14 + $0x30] sm:$0xff]
    %v1881 = vld [vmem:[#allocation14 + $0x38] sm:$0xff]
    %v1882 = vld [vmem:[#allocation14 + $0x40] sm:$0xff]
    %v1883 = vld [vmem:[#allocation14 + $0x48] sm:$0xff]
    %v1884 = vld [vmem:[#allocation14 + $0x50] sm:$0xff]
    %v1885 = vld [vmem:[#allocation14 + $0x58] sm:$0xff]
    %v1886 = vld [vmem:[#allocation14 + $0x60] sm:$0xff]
    %v1887 = vld [vmem:[#allocation14 + $0x68] sm:$0xff]
    %v1888 = vld [vmem:[#allocation14 + $0x70] sm:$0xff]
    %v1889 = vld [vmem:[#allocation14 + $0x78] sm:$0xff]
    %v1890 = vld [vmem:[#allocation6] sm:$0xff]
    %v1891 = vld [vmem:[#allocation15] sm:$0x7f]
    %vm1892 = vcmask 56320
    %v1894 = vsel %vm1892, %v1890, 0
    %vm1896 = vcmask 1046528
    %v1898 = vsel %vm1896, %v1891, 0
    %1900 = vmatprep.subr.mxu0 0.0
    %1901 = vmatpush1.msra.mxu0 %v1898
    %1902 = vmatprep.subr.mxu0 0.0
    %1903 = vmatpush1.msra.mxu0 0.0
    %1904 = vmatprep.subr.mxu0 0.0
    %1905 = vmatpush1.msra.mxu0 0.0
    %1906 = vmatprep.subr.mxu0 0.0
    %1907 = vmatpush1.msra.mxu0 0.0
    %1908 = vmatprep.subr.mxu0 0.0
    %1909 = vmatpush1.msra.mxu0 0.0
    %1910 = vmatprep.subr.mxu0 0.0
    %1911 = vmatpush1.msra.mxu0 0.0
    %1912 = vmatprep.subr.mxu0 0.0
    %1913 = vmatpush1.msra.mxu0 0.0
    %1914 = vmatprep.subr.mxu0 0.0
    %1915 = vmatpush1.msra.mxu0 0.0
    %1916 = vmatprep.subr.mxu0 0.0
    %1917 = vmatpush1.msra.mxu0 0.0
    %1918 = vmatprep.subr.mxu0 0.0
    %1919 = vmatpush1.msra.mxu0 0.0
    %1920 = vmatprep.subr.mxu0 0.0
    %1921 = vmatpush1.msra.mxu0 0.0
    %1922 = vmatprep.subr.mxu0 0.0
    %1923 = vmatpush1.msra.mxu0 0.0
    %1924 = vmatprep.subr.mxu0 0.0
    %1925 = vmatpush1.msra.mxu0 0.0
    %1926 = vmatprep.subr.mxu0 0.0
    %1927 = vmatpush1.msra.mxu0 0.0
    %1928 = vmatprep.subr.mxu0 0.0
    %1929 = vmatpush1.msra.mxu0 0.0
    %1930 = vmatprep.subr.mxu0 0.0
    %1931 = vmatpush1.msra.mxu0 0.0
    %1932 = vmatprep.subr.mxu0 0.0
    %1933 = vmatpush1.msra.mxu0 0.0
    %1934 = vmatprep.subr.mxu0 0.0
    %1935 = vmatpush1.msra.mxu0 0.0
    %1936 = vmatprep.subr.mxu0 0.0
    %1937 = vmatpush1.msra.mxu0 0.0
    %1938 = vmatprep.subr.mxu0 0.0
    %1939 = vmatpush1.msra.mxu0 0.0
    %1940 = vmatprep.subr.mxu0 0.0
    %1941 = vmatpush1.msra.mxu0 0.0
    %1942 = vmatprep.subr.mxu0 0.0
    %1943 = vmatpush1.msra.mxu0 0.0
    %1944 = vmatprep.subr.mxu0 0.0
    %1945 = vmatpush1.msra.mxu0 0.0
    %1946 = vmatprep.subr.mxu0 0.0
    %1947 = vmatpush1.msra.mxu0 0.0
    %1948 = vmatprep.subr.mxu0 0.0
    %1949 = vmatpush1.msra.mxu0 0.0
    %1950 = vmatprep.subr.mxu0 0.0
    %1951 = vmatpush1.msra.mxu0 0.0
    %1952 = vmatprep.subr.mxu0 0.0
    %1953 = vmatpush1.msra.mxu0 0.0
    %1954 = vmatprep.subr.mxu0 0.0
    %1955 = vmatpush1.msra.mxu0 0.0
    %1956 = vmatprep.subr.mxu0 0.0
    %1957 = vmatpush1.msra.mxu0 0.0
    %1958 = vmatprep.subr.mxu0 0.0
    %1959 = vmatpush1.msra.mxu0 0.0
    %1960 = vmatprep.subr.mxu0 0.0
    %1961 = vmatpush1.msra.mxu0 0.0
    %1962 = vmatprep.subr.mxu0 0.0
    %1963 = vmatpush1.msra.mxu0 0.0
    %1964 = vmatprep.mubr.f32.mxu0 0.0
    %1965 = vmatmul.mubr.f32.gmra.mrb[0].mxu0 %v1894
    %v1966 = vpop.f32.mrb[0].mxu0
    %v1967 = vadd.f32 0.0, %v1966
    %v1968 = vpop.f32.mrb[0].mxu0
    %1969 = vdwg.mxu0
    %1970 = vmatprep.subr.mxu0 0.0
    %1971 = vmatpush1.msra.mxu0 %v1874
    %1972 = vmatprep.subr.mxu0 0.0
    %1973 = vmatpush1.msra.mxu0 %v1875
    %1974 = vmatprep.subr.mxu0 0.0
    %1975 = vmatpush1.msra.mxu0 %v1876
    %1976 = vmatprep.subr.mxu0 0.0
    %1977 = vmatpush1.msra.mxu0 %v1877
    %1978 = vmatprep.subr.mxu0 0.0
    %1979 = vmatpush1.msra.mxu0 %v1878
    %1980 = vmatprep.subr.mxu0 0.0
    %1981 = vmatpush1.msra.mxu0 %v1879
    %1982 = vmatprep.subr.mxu0 0.0
    %1983 = vmatpush1.msra.mxu0 %v1880
    %1984 = vmatprep.subr.mxu0 0.0
    %1985 = vmatpush1.msra.mxu0 %v1881
    %1986 = vmatprep.subr.mxu0 0.0
    %1987 = vmatpush1.msra.mxu0 %v1882
    %1988 = vmatprep.subr.mxu0 0.0
    %1989 = vmatpush1.msra.mxu0 %v1883
    %1990 = vmatprep.subr.mxu0 0.0
    %1991 = vmatpush1.msra.mxu0 %v1884
    %1992 = vmatprep.subr.mxu0 0.0
    %1993 = vmatpush1.msra.mxu0 %v1885
    %1994 = vmatprep.subr.mxu0 0.0
    %1995 = vmatpush1.msra.mxu0 %v1886
    %1996 = vmatprep.subr.mxu0 0.0
    %1997 = vmatpush1.msra.mxu0 %v1887
    %1998 = vmatprep.subr.mxu0 0.0
    %1999 = vmatpush1.msra.mxu0 %v1888
    %2000 = vmatprep.subr.mxu0 0.0
    %2001 = vmatpush1.msra.mxu0 %v1889
    %2002 = vmatprep.subr.mxu0 0.0
    %2003 = vmatpush1.msra.mxu0 0.0
    %2004 = vmatprep.subr.mxu0 0.0
    %2005 = vmatpush1.msra.mxu0 0.0
    %2006 = vmatprep.subr.mxu0 0.0
    %2007 = vmatpush1.msra.mxu0 0.0
    %2008 = vmatprep.subr.mxu0 0.0
    %2009 = vmatpush1.msra.mxu0 0.0
    %2010 = vmatprep.subr.mxu0 0.0
    %2011 = vmatpush1.msra.mxu0 0.0
    %2012 = vmatprep.subr.mxu0 0.0
    %2013 = vmatpush1.msra.mxu0 0.0
    %2014 = vmatprep.subr.mxu0 0.0
    %2015 = vmatpush1.msra.mxu0 0.0
    %2016 = vmatprep.subr.mxu0 0.0
    %2017 = vmatpush1.msra.mxu0 0.0
    %2018 = vmatprep.subr.mxu0 0.0
    %2019 = vmatpush1.msra.mxu0 0.0
    %2020 = vmatprep.subr.mxu0 0.0
    %2021 = vmatpush1.msra.mxu0 0.0
    %2022 = vmatprep.subr.mxu0 0.0
    %2023 = vmatpush1.msra.mxu0 0.0
    %2024 = vmatprep.subr.mxu0 0.0
    %2025 = vmatpush1.msra.mxu0 0.0
    %2026 = vmatprep.subr.mxu0 0.0
    %2027 = vmatpush1.msra.mxu0 0.0
    %2028 = vmatprep.subr.mxu0 0.0
    %2029 = vmatpush1.msra.mxu0 0.0
    %2030 = vmatprep.subr.mxu0 0.0
    %2031 = vmatpush1.msra.mxu0 0.0
    %2032 = vmatprep.subr.mxu0 0.0
    %2033 = vmatpush1.msra.mxu0 0.0
    %2034 = vmatprep.mubr.f32.mxu0 0.0
    %2035 = vmatmul.mubr.f32.gmra.mrb[0].mxu0 %v1871
    %v2036 = vpop.f32.mrb[0].mxu0
    %v2037 = vadd.f32 %v1967, %v2036
    %v2038 = vpop.f32.mrb[0].mxu0
    %2039 = vdwg.mxu0
    %v2040 = vld [vmem:[#allocation17] sm:$0x1]
    %v2042 = vlaneseq
    %v2043 = vshrl.u32 %v2042, 7
    %v2044 = vsub.s32 0, %v2043
    %v2045 = vrot.slane %v2040, %v2044
    %v2047 = vadd.f32 %v2037, %v2045
    %2048 = vst [vmem:[#allocation19] sm:$0xff] %v2047
    // Predicated region
    $region74: #{rnn_concat_encoder_forward.1} parent=1 // pred_check
      _
    $region75: #{rnn_concat_encoder_forward.1} parent=1 // pred_check_branch
      %2050 = sbr.rel (0) target = $region77
    $region76: #{rnn_concat_encoder_forward.1} parent=1 // pred_region
      %s2052 = ssub.s32 1024, 1024
      %2053 = vsyncadd [#allocation5], %s2052
      %s2054 = sshll.u32 [#allocation18], 4
      %s2055 = int_to_ptr.vmem [resolvable:$true] %s2054
      %2060 = dma.vmem_to_hbm [thread:$0]  %s2055, 1024, %s9, [#allocation5], 128, 128, 8
    $region77: #{rnn_concat_encoder_forward.1} parent=1 // pred_fallthru
      _
    // Predicated region
    $region78: #{rnn_concat_encoder_forward.1} parent=1 // pred_check
      _
    $region79: #{rnn_concat_encoder_forward.1} parent=1 // pred_check_branch
      %2062 = sbr.rel (0) target = $region81
    $region80: #{rnn_concat_encoder_forward.1} parent=1 // pred_region
      %s2064 = ssub.s32 128, 128
      %2065 = vsyncadd [#allocation20], %s2064
      %s2067 = sshll.u32 [#allocation19], 4
      %s2068 = int_to_ptr.vmem [resolvable:$true] %s2067
      %2070 = dma.vmem_to_hbm [thread:$0]  %s2068, 128, %s10, [#allocation20]
    $region81: #{rnn_concat_encoder_forward.1} parent=1 // pred_fallthru
      _
    // Predicated region
    $region82: #{rnn_concat_encoder_forward.1} parent=1 // pred_check
      _
    $region83: #{rnn_concat_encoder_forward.1} parent=1 // pred_check_branch
      %2072 = sbr.rel (0) target = $region85
    $region84: #{rnn_concat_encoder_forward.1} parent=1 // pred_region
      %2073 = dma.done [#allocation5], 1024
    $region85: #{rnn_concat_encoder_forward.1} parent=1 // pred_fallthru
      _
    // Predicated region
    $region86: #{rnn_concat_encoder_forward.1} parent=1 // pred_check
      _
    $region87: #{rnn_concat_encoder_forward.1} parent=1 // pred_check_branch
      %2075 = sbr.rel (0) target = $region89
    $region88: #{rnn_concat_encoder_forward.1} parent=1 // pred_region
      %2076 = dma.done [#allocation20], 128
    $region89: #{rnn_concat_encoder_forward.1} parent=1 // pred_fallthru
      _
    %2077 = vsyncpa [#allocation4], 1
    %2078 = vsyncpa [#allocation7], 1
    %2079 = vsyncpa [#allocation10], 1
    %2080 = vsyncpa [#allocation13], 1
    %2081 = vsyncpa [#allocation16], 1
    %2082 = vsyncpa [#allocation5], 1
    %2083 = vsyncpa [#allocation20], 1

</llo_original>
